<compile_context>
chip_gen: v7x
topology: tpu7x:2x2x1
jax: 0.10.0
libtpu: 0.0.40
codegen_flags: <defaults>
</compile_context>

<pallas_src>
import jax
import jax.numpy as jnp
import numpy as np
from jax.experimental import pallas as pl
from jax.experimental.pallas import tpu as pltpu


# ----------------------------------------------------------------------------
# Pallas kernel
# ----------------------------------------------------------------------------
def dm2_kernel(hidden_ref, fc8_ref,
               w1h_ref, w1f_ref, w2_ref, w3_ref, w4_ref, w5_ref, w6_ref,
               bias_ref, out_ref):
    f32, bf16 = jnp.float32, jnp.bfloat16

    def bias(row, n):
        # packed biases: one sublane row per layer, f32, broadcasts over batch
        return bias_ref[row:row + 1, :n]                       # (1, n)

    # layer 1 (cat(hidden, visual_emb) @ W1 -> 256), BN folded, concat removed,
    # visual_emb fused:  ReLU( hidden @ W1h' + fc8 @ (Wv @ W1v') + b1'' )
    y = jnp.dot(hidden_ref[...].astype(bf16), w1h_ref[...],
                preferred_element_type=f32)
    y = y + jnp.dot(fc8_ref[...].astype(bf16), w1f_ref[...],
                    preferred_element_type=f32)
    x = jnp.maximum(y + bias(0, 256), 0.0)                     # (B, 256)

    def lin_relu(x, w_ref, row):
        y = jnp.dot(x.astype(bf16), w_ref[...],
                    preferred_element_type=f32) + bias(row, 128)
        return jnp.maximum(y, 0.0)

    x = lin_relu(x, w2_ref, 1)   # 256 -> 128                 (BN folded)
    x = lin_relu(x, w3_ref, 2)   # 128 -> 64  (padded to 128,  BN folded)
    x = lin_relu(x, w4_ref, 3)   # 64  -> 16  (padded to 128,  BN folded)
    x = lin_relu(x, w5_ref, 4)   # 16  -> 4   (padded to 128)

    y = jnp.dot(x.astype(bf16), w6_ref[...],
                preferred_element_type=f32) + bias(5, 128)     # 4 -> 2 (padded)
    out_ref[...] = y[:, :2]                                    # logits


def dm2_forward(hidden_states, fc8, weights, bias):
    """Everything fits in VMEM -> single invocation, no grid."""
    B = hidden_states.shape[0]
    flat = [hidden_states, fc8, *weights, bias]
    vmem = pl.BlockSpec(memory_space=pltpu.MemorySpace.VMEM)
    return pl.pallas_call(
        dm2_kernel,
        out_shape=jax.ShapeDtypeStruct((B, 2), jnp.float32),
        in_specs=[vmem] * len(flat),
        out_specs=vmem,
        compiler_params=pltpu.CompilerParams(vmem_limit_bytes=16 << 20),
    )(*flat)


# ----------------------------------------------------------------------------
# Synthetic parameters (shapes from DM2.__init__) + host-side folding/fusion
# ----------------------------------------------------------------------------
def init_reference_params(key):
    """Deterministic synthetic parameters in (in, out) layout + BN stats."""
    eps = 1e-5
    lin_dims = [(1000, 512), (1024, 256), (256, 128),
                (128, 64), (64, 16), (16, 4), (4, 2)]
    bn_dims = [256, 128, 64, 16]            # BN after the first 4 MLP linears
    keys = iter(jax.random.split(key, 64))
    lin, bn = [], []
    for i, (din, dout) in enumerate(lin_dims):
        w = jax.random.normal(next(keys), (din, dout), jnp.float32) / np.sqrt(din)
        b = 0.1 * jax.random.normal(next(keys), (1, dout), jnp.float32)
        lin.append((w, b))
        if 1 <= i <= 4:
            n = bn_dims[i - 1]
            gamma = 1.0 + 0.1 * jax.random.normal(next(keys), (1, n), jnp.float32)
            beta = 0.1 * jax.random.normal(next(keys), (1, n), jnp.float32)
            mean = 0.1 * jax.random.normal(next(keys), (1, n), jnp.float32)
            var = jax.random.uniform(next(keys), (1, n), jnp.float32,
                                     minval=0.5, maxval=1.5)
            bn.append((gamma, beta, mean, var))
    return {"lin": lin, "bn": bn, "eps": eps}


def pack_params(ref):
    """Fold BN, fuse visual_emb into layer 1, pad tail to 128 lanes, cast bf16,
    and pack all biases into a single (8, 256) f32 array."""
    eps = ref["eps"]
    (wv, bv), (w1, b1), (w2, b2), (w3, b3), (w4, b4), (w5, b5), (w6, b6) = ref["lin"]

    def fold(w, b, bn_params):                       # eval-mode BN -> Linear
        gamma, beta, mean, var = bn_params
        scale = gamma / jnp.sqrt(var + eps)          # (1, n)
        return w * scale, b * scale + (beta - mean * scale)

    w1f, b1f = fold(w1, b1, ref["bn"][0])
    w2f, b2f = fold(w2, b2, ref["bn"][1])
    w3f, b3f = fold(w3, b3, ref["bn"][2])
    w4f, b4f = fold(w4, b4, ref["bn"][3])

    # split layer-1 weight into hidden/visual halves; fuse visual_emb linear
    w1h = w1f[:512]                                  # (512, 256)
    w1v = w1f[512:]                                  # (512, 256)
    w1fc8 = wv @ w1v                                 # (1000, 256)
    b1p = b1f + bv @ w1v                             # (1, 256)

    def pad(w, b, din_p, dout_p):                    # exact zero padding
        wp = jnp.zeros((din_p, dout_p), jnp.float32).at[:w.shape[0], :w.shape[1]].set(w)
        bp = jnp.zeros((1, dout_p), jnp.float32).at[:, :b.shape[1]].set(b)
        return wp, bp

    w3p, b3p = pad(w3f, b3f, 128, 128)
    w4p, b4p = pad(w4f, b4f, 128, 128)
    w5p, b5p = pad(w5, b5, 128, 128)
    w6p, b6p = pad(w6, b6, 128, 128)

    bias = jnp.zeros((8, 256), jnp.float32)
    bias = bias.at[0, :256].set(b1p[0])
    bias = bias.at[1, :128].set(b2f[0])
    bias = bias.at[2, :128].set(b3p[0])
    bias = bias.at[3, :128].set(b4p[0])
    bias = bias.at[4, :128].set(b5p[0])
    bias = bias.at[5, :128].set(b6p[0])

    bf16 = jnp.bfloat16
    weights = [w1h.astype(bf16), w1fc8.astype(bf16), w2f.astype(bf16),
               w3p.astype(bf16), w4p.astype(bf16), w5p.astype(bf16),
               w6p.astype(bf16)]
    return weights, bias


# ----------------------------------------------------------------------------
# References
# ----------------------------------------------------------------------------
def dm2_reference(hidden_states, fc8, ref):
    """Plain-JAX f32 reference of the original (unfused) DM2 forward."""
    eps = ref["eps"]
    (wv, bv), *mlp = ref["lin"]
    visual = fc8 @ wv + bv
    x = jnp.concatenate([hidden_states, visual], axis=-1)
    for i, (w, b) in enumerate(mlp):
        x = x @ w + b
        if i < 4:
            gamma, beta, mean, var = ref["bn"][i]
            x = (x - mean) / jnp.sqrt(var + eps) * gamma + beta
        if i < 5:
            x = jnp.maximum(x, 0.0)
    return x


def dm2_kernel_mirror(hidden_states, fc8, weights, bias):
    """Plain-JAX mirror of the exact math the kernel performs (bf16 weights)."""
    bf16, f32 = jnp.bfloat16, jnp.float32
    w1h, w1fc8, w2, w3, w4, w5, w6 = weights
    y = jnp.dot(hidden_states.astype(bf16), w1h, preferred_element_type=f32)
    y = y + jnp.dot(fc8.astype(bf16), w1fc8, preferred_element_type=f32)
    x = jnp.maximum(y + bias[0:1, :256], 0.0)
    for i, w in enumerate([w2, w3, w4, w5]):
        x = jnp.maximum(jnp.dot(x.astype(bf16), w, preferred_element_type=f32)
                        + bias[i + 1:i + 2, :128], 0.0)
    y = jnp.dot(x.astype(bf16), w6, preferred_element_type=f32) + bias[5:6, :128]
    return y[:, :2]


# ----------------------------------------------------------------------------
if __name__ == "__main__":
    key = jax.random.PRNGKey(0)
    k_h, k_f, k_p = jax.random.split(key, 3)

    B = 8
    hidden_states = jax.random.normal(k_h, (B, 512), jnp.float32)
    fc8 = jax.random.normal(k_f, (B, 1000), jnp.float32)

    ref = init_reference_params(k_p)
    weights, bias = pack_params(ref)

    out = dm2_forward(hidden_states, fc8, weights, bias)
    out = jax.block_until_ready(out)
    assert out.shape == (B, 2)

    # 1) kernel implements exactly the intended (folded/fused/padded) math
    mirror = dm2_kernel_mirror(hidden_states, fc8, weights, bias)
    np.testing.assert_allclose(np.asarray(out), np.asarray(mirror),
                               rtol=1e-3, atol=1e-3)
    # 2) folding/fusion/bf16 stay faithful to the original f32 DM2 forward
    exact = dm2_reference(hidden_states, fc8, ref)
    np.testing.assert_allclose(np.asarray(out), np.asarray(exact),
                               rtol=5e-2, atol=5e-2)
    print("KERNEL_OK")
</pallas_src>

<mosaic_0001>
module attributes {stable_mosaic.version = 11 : i64} {
  func.func @dm2_kernel(%arg0: memref<8x512xf32, #tpu.memory_space<vmem>>, %arg1: memref<8x1000xf32, #tpu.memory_space<vmem>>, %arg2: memref<512x256xbf16, #tpu.memory_space<vmem>>, %arg3: memref<1000x256xbf16, #tpu.memory_space<vmem>>, %arg4: memref<256x128xbf16, #tpu.memory_space<vmem>>, %arg5: memref<128x128xbf16, #tpu.memory_space<vmem>>, %arg6: memref<128x128xbf16, #tpu.memory_space<vmem>>, %arg7: memref<128x128xbf16, #tpu.memory_space<vmem>>, %arg8: memref<128x128xbf16, #tpu.memory_space<vmem>>, %arg9: memref<8x256xf32, #tpu.memory_space<vmem>>, %arg10: memref<8x2xf32, #tpu.memory_space<vmem>>) attributes {dimension_semantics = [], scalar_prefetch = 0 : i64, scratch_operands = 0 : i64, tpu.core_type = #tpu.core_type<tc>} {
    %c0 = arith.constant 0 : index
    %c0_0 = arith.constant 0 : index
    %0 = vector.load %arg0[%c0, %c0_0] : memref<8x512xf32, #tpu.memory_space<vmem>>, vector<8x512xf32>
    %1 = arith.truncf %0 : vector<8x512xf32> to vector<8x512xbf16>
    %c0_1 = arith.constant 0 : index
    %c0_2 = arith.constant 0 : index
    %2 = vector.load %arg2[%c0_1, %c0_2] : memref<512x256xbf16, #tpu.memory_space<vmem>>, vector<512x256xbf16>
    %cst = arith.constant dense<0.000000e+00> : vector<8x256xf32>
    %3 = tpu.matmul %1, %2, %cst {dimension_numbers = #tpu.dot_dimension_numbers<[1], [0], [0], [1], [0, 0, 1, 1], [], []>} : vector<8x512xbf16>, vector<512x256xbf16>, vector<8x256xf32> -> vector<8x256xf32>
    %c0_3 = arith.constant 0 : index
    %c0_4 = arith.constant 0 : index
    %4 = vector.load %arg1[%c0_3, %c0_4] : memref<8x1000xf32, #tpu.memory_space<vmem>>, vector<8x1000xf32>
    %5 = arith.truncf %4 : vector<8x1000xf32> to vector<8x1000xbf16>
    %c0_5 = arith.constant 0 : index
    %c0_6 = arith.constant 0 : index
    %6 = vector.load %arg3[%c0_5, %c0_6] : memref<1000x256xbf16, #tpu.memory_space<vmem>>, vector<1000x256xbf16>
    %cst_7 = arith.constant dense<0.000000e+00> : vector<8x256xf32>
    %7 = tpu.matmul %5, %6, %cst_7 {dimension_numbers = #tpu.dot_dimension_numbers<[1], [0], [0], [1], [0, 0, 1, 1], [], []>} : vector<8x1000xbf16>, vector<1000x256xbf16>, vector<8x256xf32> -> vector<8x256xf32>
    %8 = arith.addf %3, %7 : vector<8x256xf32>
    %c0_8 = arith.constant 0 : index
    %c0_9 = arith.constant 0 : index
    %9 = vector.load %arg9[%c0_8, %c0_9] : memref<8x256xf32, #tpu.memory_space<vmem>>, vector<1x256xf32>
    %10 = vector.broadcast %9 : vector<1x256xf32> to vector<8x256xf32>
    %11 = arith.addf %8, %10 : vector<8x256xf32>
    %cst_10 = arith.constant 0.000000e+00 : f32
    %12 = vector.broadcast %cst_10 : f32 to vector<8x256xf32>
    %13 = arith.maximumf %11, %12 : vector<8x256xf32>
    %14 = arith.truncf %13 : vector<8x256xf32> to vector<8x256xbf16>
    %c0_11 = arith.constant 0 : index
    %c0_12 = arith.constant 0 : index
    %15 = vector.load %arg4[%c0_11, %c0_12] : memref<256x128xbf16, #tpu.memory_space<vmem>>, vector<256x128xbf16>
    %cst_13 = arith.constant dense<0.000000e+00> : vector<8x128xf32>
    %16 = tpu.matmul %14, %15, %cst_13 {dimension_numbers = #tpu.dot_dimension_numbers<[1], [0], [0], [1], [0, 0, 1, 1], [], []>} : vector<8x256xbf16>, vector<256x128xbf16>, vector<8x128xf32> -> vector<8x128xf32>
    %c1 = arith.constant 1 : index
    %c0_14 = arith.constant 0 : index
    %17 = vector.load %arg9[%c1, %c0_14] : memref<8x256xf32, #tpu.memory_space<vmem>>, vector<1x128xf32>
    %18 = vector.broadcast %17 : vector<1x128xf32> to vector<8x128xf32>
    %19 = arith.addf %16, %18 : vector<8x128xf32>
    %cst_15 = arith.constant 0.000000e+00 : f32
    %20 = vector.broadcast %cst_15 : f32 to vector<8x128xf32>
    %21 = arith.maximumf %19, %20 : vector<8x128xf32>
    %22 = arith.truncf %21 : vector<8x128xf32> to vector<8x128xbf16>
    %c0_16 = arith.constant 0 : index
    %c0_17 = arith.constant 0 : index
    %23 = vector.load %arg5[%c0_16, %c0_17] : memref<128x128xbf16, #tpu.memory_space<vmem>>, vector<128x128xbf16>
    %cst_18 = arith.constant dense<0.000000e+00> : vector<8x128xf32>
    %24 = tpu.matmul %22, %23, %cst_18 {dimension_numbers = #tpu.dot_dimension_numbers<[1], [0], [0], [1], [0, 0, 1, 1], [], []>} : vector<8x128xbf16>, vector<128x128xbf16>, vector<8x128xf32> -> vector<8x128xf32>
    %c2 = arith.constant 2 : index
    %c0_19 = arith.constant 0 : index
    %25 = vector.load %arg9[%c2, %c0_19] : memref<8x256xf32, #tpu.memory_space<vmem>>, vector<1x128xf32>
    %26 = vector.broadcast %25 : vector<1x128xf32> to vector<8x128xf32>
    %27 = arith.addf %24, %26 : vector<8x128xf32>
    %cst_20 = arith.constant 0.000000e+00 : f32
    %28 = vector.broadcast %cst_20 : f32 to vector<8x128xf32>
    %29 = arith.maximumf %27, %28 : vector<8x128xf32>
    %30 = arith.truncf %29 : vector<8x128xf32> to vector<8x128xbf16>
    %c0_21 = arith.constant 0 : index
    %c0_22 = arith.constant 0 : index
    %31 = vector.load %arg6[%c0_21, %c0_22] : memref<128x128xbf16, #tpu.memory_space<vmem>>, vector<128x128xbf16>
    %cst_23 = arith.constant dense<0.000000e+00> : vector<8x128xf32>
    %32 = tpu.matmul %30, %31, %cst_23 {dimension_numbers = #tpu.dot_dimension_numbers<[1], [0], [0], [1], [0, 0, 1, 1], [], []>} : vector<8x128xbf16>, vector<128x128xbf16>, vector<8x128xf32> -> vector<8x128xf32>
    %c3 = arith.constant 3 : index
    %c0_24 = arith.constant 0 : index
    %33 = vector.load %arg9[%c3, %c0_24] : memref<8x256xf32, #tpu.memory_space<vmem>>, vector<1x128xf32>
    %34 = vector.broadcast %33 : vector<1x128xf32> to vector<8x128xf32>
    %35 = arith.addf %32, %34 : vector<8x128xf32>
    %cst_25 = arith.constant 0.000000e+00 : f32
    %36 = vector.broadcast %cst_25 : f32 to vector<8x128xf32>
    %37 = arith.maximumf %35, %36 : vector<8x128xf32>
    %38 = arith.truncf %37 : vector<8x128xf32> to vector<8x128xbf16>
    %c0_26 = arith.constant 0 : index
    %c0_27 = arith.constant 0 : index
    %39 = vector.load %arg7[%c0_26, %c0_27] : memref<128x128xbf16, #tpu.memory_space<vmem>>, vector<128x128xbf16>
    %cst_28 = arith.constant dense<0.000000e+00> : vector<8x128xf32>
    %40 = tpu.matmul %38, %39, %cst_28 {dimension_numbers = #tpu.dot_dimension_numbers<[1], [0], [0], [1], [0, 0, 1, 1], [], []>} : vector<8x128xbf16>, vector<128x128xbf16>, vector<8x128xf32> -> vector<8x128xf32>
    %c4 = arith.constant 4 : index
    %c0_29 = arith.constant 0 : index
    %41 = vector.load %arg9[%c4, %c0_29] : memref<8x256xf32, #tpu.memory_space<vmem>>, vector<1x128xf32>
    %42 = vector.broadcast %41 : vector<1x128xf32> to vector<8x128xf32>
    %43 = arith.addf %40, %42 : vector<8x128xf32>
    %cst_30 = arith.constant 0.000000e+00 : f32
    %44 = vector.broadcast %cst_30 : f32 to vector<8x128xf32>
    %45 = arith.maximumf %43, %44 : vector<8x128xf32>
    %46 = arith.truncf %45 : vector<8x128xf32> to vector<8x128xbf16>
    %c0_31 = arith.constant 0 : index
    %c0_32 = arith.constant 0 : index
    %47 = vector.load %arg8[%c0_31, %c0_32] : memref<128x128xbf16, #tpu.memory_space<vmem>>, vector<128x128xbf16>
    %cst_33 = arith.constant dense<0.000000e+00> : vector<8x128xf32>
    %48 = tpu.matmul %46, %47, %cst_33 {dimension_numbers = #tpu.dot_dimension_numbers<[1], [0], [0], [1], [0, 0, 1, 1], [], []>} : vector<8x128xbf16>, vector<128x128xbf16>, vector<8x128xf32> -> vector<8x128xf32>
    %c5 = arith.constant 5 : index
    %c0_34 = arith.constant 0 : index
    %49 = vector.load %arg9[%c5, %c0_34] : memref<8x256xf32, #tpu.memory_space<vmem>>, vector<1x128xf32>
    %50 = vector.broadcast %49 : vector<1x128xf32> to vector<8x128xf32>
    %51 = arith.addf %48, %50 : vector<8x128xf32>
    %52 = vector.extract_strided_slice %51 {offsets = [0, 0], sizes = [8, 2], strides = [1, 1]} : vector<8x128xf32> to vector<8x2xf32>
    %c0_35 = arith.constant 0 : index
    %c0_36 = arith.constant 0 : index
    %53 = vector.load %arg10[%c0_35, %c0_36] : memref<8x2xf32, #tpu.memory_space<vmem>>, vector<8x2xf32>
    tpu.vector_store %arg10[%c0_35, %c0_36], %52 {strides = array<i32>} : memref<8x2xf32, #tpu.memory_space<vmem>>, vector<8x2xf32>,
    return
  }
}

</mosaic_0001>

<llo_original>
// kernel: tpu_custom_call.1
$region0: #{tpu_custom_call.1}
  #allocation0 [shape = 'u32[]', space=smem, size = 0x4, offset = 0x4, fixed_abs, tag = 'smem constant byte address 0x4 - core index']
  #allocation1 [shape = 'u32[144,128]{1,0:T(1,128)}', space=vmem, size = 0x12000, scoped, tag = 'internal scratch']
  %s0 = inlined_call_operand.hbm [shape: f32[8,512], index: 0, kind: input, shape index: {}]
  %s1 = inlined_call_operand.hbm [shape: f32[8,1000], index: 1, kind: input, shape index: {}]
  %s2 = inlined_call_operand.hbm [shape: bf16[512,256], index: 2, kind: input, shape index: {}]
  %s3 = inlined_call_operand.hbm [shape: bf16[1000,256], index: 3, kind: input, shape index: {}]
  %s4 = inlined_call_operand.hbm [shape: bf16[256,128], index: 4, kind: input, shape index: {}]
  %s5 = inlined_call_operand.hbm [shape: bf16[128,128], index: 5, kind: input, shape index: {}]
  %s6 = inlined_call_operand.hbm [shape: bf16[128,128], index: 6, kind: input, shape index: {}]
  %s7 = inlined_call_operand.hbm [shape: bf16[128,128], index: 7, kind: input, shape index: {}]
  %s8 = inlined_call_operand.hbm [shape: bf16[128,128], index: 8, kind: input, shape index: {}]
  %s9 = inlined_call_operand.vmem [shape: f32[8,256], index: 9, kind: input, shape index: {}]
  %s10 = inlined_call_operand.vmem [shape: f32[8,2], index: 10, kind: output, shape index: {}]
  %s11 = sld [smem:[#allocation0]]
  $region86: #{tpu_custom_call.1} parent=0
    _
  %s13 = ssub.s32 1, %s11
  %s14 = scalar_select 0, %s13, %s11
  $region1: #{tpu_custom_call.1} parent=0
    #allocation2 [shape = 'u8[16384]{0}', space=vmem, size = 0x4000, scoped, tag = 'input window, operand 0, single buffered']
    #allocation3 [shape = 's32[1]{0}', space=sflag, size = 0x4, scoped, tag = 'scoped memory for tpu_custom_call.1']
    #allocation4 [shape = 'u8[32768]{0}', space=vmem, size = 0x8000, scoped, tag = 'input window, operand 1, single buffered']
    #allocation5 [shape = 's32[1]{0}', space=sflag, size = 0x4, scoped, tag = 'scoped memory for tpu_custom_call.1']
    #allocation6 [shape = 'u8[262144]{0}', space=vmem, size = 0x40000, scoped, tag = 'input window, operand 2, single buffered']
    #allocation7 [shape = 'u8[512000]{0}', space=vmem, size = 0x7d000, scoped, tag = 'input window, operand 3, single buffered']
    #allocation8 [shape = 's32[1]{0}', space=sflag, size = 0x4, scoped, tag = 'scoped memory for tpu_custom_call.1']
    #allocation9 [shape = 'u8[65536]{0}', space=vmem, size = 0x10000, scoped, tag = 'input window, operand 4, single buffered']
    #allocation10 [shape = 'u8[32768]{0}', space=vmem, size = 0x8000, scoped, tag = 'input window, operand 5, single buffered']
    #allocation11 [shape = 's32[1]{0}', space=sflag, size = 0x4, scoped, tag = 'scoped memory for tpu_custom_call.1']
    #allocation12 [shape = 'u8[32768]{0}', space=vmem, size = 0x8000, scoped, tag = 'input window, operand 6, single buffered']
    #allocation13 [shape = 'u8[32768]{0}', space=vmem, size = 0x8000, scoped, tag = 'input window, operand 7, single buffered']
    #allocation14 [shape = 's32[1]{0}', space=sflag, size = 0x4, scoped, tag = 'scoped memory for tpu_custom_call.1']
    #allocation15 [shape = 'u8[32768]{0}', space=vmem, size = 0x8000, scoped, tag = 'input window, operand 8, single buffered']
    %15 = vsyncpa [#allocation3], 0
    %16 = vsyncpa [#allocation5], 0
    %17 = vsyncpa [#allocation8], 0
    %18 = vsyncpa [#allocation11], 0
    %19 = vsyncpa [#allocation14], 0
    // Predicated region
    $region2: #{tpu_custom_call.1} parent=1 // pred_check
      _
    $region3: #{tpu_custom_call.1} parent=1 // pred_check_branch
      %21 = sbr.rel (0) target = $region5
    $region4: #{tpu_custom_call.1} parent=1 // pred_region
      %s23 = ssub.s32 512, 512
      %24 = vsyncadd [#allocation3], %s23
      %s26 = sshll.u32 [#allocation2], 4
      %s27 = int_to_ptr.vmem [resolvable:$true] %s26
      %29 = dma.hbm_to_vmem [thread:$0]  %s0, 512, %s27, [#allocation3]
    $region5: #{tpu_custom_call.1} parent=1 // pred_fallthru
      _
    // Predicated region
    $region6: #{tpu_custom_call.1} parent=1 // pred_check
      _
    $region7: #{tpu_custom_call.1} parent=1 // pred_check_branch
      %31 = sbr.rel (0) target = $region9
    $region8: #{tpu_custom_call.1} parent=1 // pred_region
      %s33 = ssub.s32 1024, 1024
      %34 = vsyncadd [#allocation5], %s33
      %s36 = sshll.u32 [#allocation4], 4
      %s37 = int_to_ptr.vmem [resolvable:$true] %s36
      %39 = dma.hbm_to_vmem [thread:$0]  %s1, 1024, %s37, [#allocation5]
    $region9: #{tpu_custom_call.1} parent=1 // pred_fallthru
      _
    // Predicated region
    $region10: #{tpu_custom_call.1} parent=1 // pred_check
      _
    $region11: #{tpu_custom_call.1} parent=1 // pred_check_branch
      %41 = sbr.rel (0) target = $region13
    $region12: #{tpu_custom_call.1} parent=1 // pred_region
      %s43 = ssub.s32 8192, 8192
      %44 = vsyncadd [#allocation5], %s43
      %s45 = sshll.u32 [#allocation6], 4
      %s46 = int_to_ptr.vmem [resolvable:$true] %s45
      %51 = dma.hbm_to_vmem [thread:$0]  %s2, 8192, %s46, [#allocation5], 128, 128, 8
    $region13: #{tpu_custom_call.1} parent=1 // pred_fallthru
      _
    // Predicated region
    $region14: #{tpu_custom_call.1} parent=1 // pred_check
      _
    $region15: #{tpu_custom_call.1} parent=1 // pred_check_branch
      %53 = sbr.rel (0) target = $region17
    $region16: #{tpu_custom_call.1} parent=1 // pred_region
      %s55 = ssub.s32 16000, 16000
      %56 = vsyncadd [#allocation8], %s55
      %s57 = sshll.u32 [#allocation7], 4
      %s58 = int_to_ptr.vmem [resolvable:$true] %s57
      %63 = dma.hbm_to_vmem [thread:$0]  %s3, 16000, %s58, [#allocation8], 128, 128, 8
    $region17: #{tpu_custom_call.1} parent=1 // pred_fallthru
      _
    // Predicated region
    $region18: #{tpu_custom_call.1} parent=1 // pred_check
      _
    $region19: #{tpu_custom_call.1} parent=1 // pred_check_branch
      %65 = sbr.rel (0) target = $region21
    $region20: #{tpu_custom_call.1} parent=1 // pred_region
      %s67 = ssub.s32 2048, 2048
      %68 = vsyncadd [#allocation8], %s67
      %s69 = sshll.u32 [#allocation9], 4
      %s70 = int_to_ptr.vmem [resolvable:$true] %s69
      %75 = dma.hbm_to_vmem [thread:$0]  %s4, 2048, %s70, [#allocation8], 64, 64, 4
    $region21: #{tpu_custom_call.1} parent=1 // pred_fallthru
      _
    // Predicated region
    $region22: #{tpu_custom_call.1} parent=1 // pred_check
      _
    $region23: #{tpu_custom_call.1} parent=1 // pred_check_branch
      %77 = sbr.rel (0) target = $region25
    $region24: #{tpu_custom_call.1} parent=1 // pred_region
      %s79 = ssub.s32 1024, 1024
      %80 = vsyncadd [#allocation11], %s79
      %s81 = sshll.u32 [#allocation10], 4
      %s82 = int_to_ptr.vmem [resolvable:$true] %s81
      %87 = dma.hbm_to_vmem [thread:$0]  %s5, 1024, %s82, [#allocation11], 64, 64, 4
    $region25: #{tpu_custom_call.1} parent=1 // pred_fallthru
      _
    // Predicated region
    $region26: #{tpu_custom_call.1} parent=1 // pred_check
      _
    $region27: #{tpu_custom_call.1} parent=1 // pred_check_branch
      %89 = sbr.rel (0) target = $region29
    $region28: #{tpu_custom_call.1} parent=1 // pred_region
      %s91 = ssub.s32 1024, 1024
      %92 = vsyncadd [#allocation11], %s91
      %s93 = sshll.u32 [#allocation12], 4
      %s94 = int_to_ptr.vmem [resolvable:$true] %s93
      %99 = dma.hbm_to_vmem [thread:$0]  %s6, 1024, %s94, [#allocation11], 64, 64, 4
    $region29: #{tpu_custom_call.1} parent=1 // pred_fallthru
      _
    // Predicated region
    $region30: #{tpu_custom_call.1} parent=1 // pred_check
      _
    $region31: #{tpu_custom_call.1} parent=1 // pred_check_branch
      %101 = sbr.rel (0) target = $region33
    $region32: #{tpu_custom_call.1} parent=1 // pred_region
      %s103 = ssub.s32 1024, 1024
      %104 = vsyncadd [#allocation14], %s103
      %s105 = sshll.u32 [#allocation13], 4
      %s106 = int_to_ptr.vmem [resolvable:$true] %s105
      %111 = dma.hbm_to_vmem [thread:$0]  %s7, 1024, %s106, [#allocation14], 64, 64, 4
    $region33: #{tpu_custom_call.1} parent=1 // pred_fallthru
      _
    // Predicated region
    $region34: #{tpu_custom_call.1} parent=1 // pred_check
      _
    $region35: #{tpu_custom_call.1} parent=1 // pred_check_branch
      %113 = sbr.rel (0) target = $region37
    $region36: #{tpu_custom_call.1} parent=1 // pred_region
      %s115 = ssub.s32 1024, 1024
      %116 = vsyncadd [#allocation14], %s115
      %s117 = sshll.u32 [#allocation15], 4
      %s118 = int_to_ptr.vmem [resolvable:$true] %s117
      %123 = dma.hbm_to_vmem [thread:$0]  %s8, 1024, %s118, [#allocation14], 64, 64, 4
    $region37: #{tpu_custom_call.1} parent=1 // pred_fallthru
      _
    // Predicated region
    $region38: #{tpu_custom_call.1} parent=1 // pred_check
      _
    $region39: #{tpu_custom_call.1} parent=1 // pred_check_branch
      %125 = sbr.rel (0) target = $region41
    $region40: #{tpu_custom_call.1} parent=1 // pred_region
      _
    $region41: #{tpu_custom_call.1} parent=1 // pred_fallthru
      _
    // Predicated region
    $region42: #{tpu_custom_call.1} parent=1 // pred_check
      _
    $region43: #{tpu_custom_call.1} parent=1 // pred_check_branch
      %127 = sbr.rel (0) target = $region45
    $region44: #{tpu_custom_call.1} parent=1 // pred_region
      %128 = dma.done [#allocation3], 512
    $region45: #{tpu_custom_call.1} parent=1 // pred_fallthru
      _
    // Predicated region
    $region46: #{tpu_custom_call.1} parent=1 // pred_check
      _
    $region47: #{tpu_custom_call.1} parent=1 // pred_check_branch
      %130 = sbr.rel (0) target = $region49
    $region48: #{tpu_custom_call.1} parent=1 // pred_region
      %131 = dma.done [#allocation5], 1024
    $region49: #{tpu_custom_call.1} parent=1 // pred_fallthru
      _
    // Predicated region
    $region50: #{tpu_custom_call.1} parent=1 // pred_check
      _
    $region51: #{tpu_custom_call.1} parent=1 // pred_check_branch
      %133 = sbr.rel (0) target = $region53
    $region52: #{tpu_custom_call.1} parent=1 // pred_region
      %134 = dma.done [#allocation5], 8192
    $region53: #{tpu_custom_call.1} parent=1 // pred_fallthru
      _
    // Predicated region
    $region54: #{tpu_custom_call.1} parent=1 // pred_check
      _
    $region55: #{tpu_custom_call.1} parent=1 // pred_check_branch
      %136 = sbr.rel (0) target = $region57
    $region56: #{tpu_custom_call.1} parent=1 // pred_region
      %137 = dma.done [#allocation8], 16000
    $region57: #{tpu_custom_call.1} parent=1 // pred_fallthru
      _
    // Predicated region
    $region58: #{tpu_custom_call.1} parent=1 // pred_check
      _
    $region59: #{tpu_custom_call.1} parent=1 // pred_check_branch
      %139 = sbr.rel (0) target = $region61
    $region60: #{tpu_custom_call.1} parent=1 // pred_region
      %140 = dma.done [#allocation8], 2048
    $region61: #{tpu_custom_call.1} parent=1 // pred_fallthru
      _
    // Predicated region
    $region62: #{tpu_custom_call.1} parent=1 // pred_check
      _
    $region63: #{tpu_custom_call.1} parent=1 // pred_check_branch
      %142 = sbr.rel (0) target = $region65
    $region64: #{tpu_custom_call.1} parent=1 // pred_region
      %143 = dma.done [#allocation11], 1024
    $region65: #{tpu_custom_call.1} parent=1 // pred_fallthru
      _
    // Predicated region
    $region66: #{tpu_custom_call.1} parent=1 // pred_check
      _
    $region67: #{tpu_custom_call.1} parent=1 // pred_check_branch
      %145 = sbr.rel (0) target = $region69
    $region68: #{tpu_custom_call.1} parent=1 // pred_region
      %146 = dma.done [#allocation11], 1024
    $region69: #{tpu_custom_call.1} parent=1 // pred_fallthru
      _
    // Predicated region
    $region70: #{tpu_custom_call.1} parent=1 // pred_check
      _
    $region71: #{tpu_custom_call.1} parent=1 // pred_check_branch
      %148 = sbr.rel (0) target = $region73
    $region72: #{tpu_custom_call.1} parent=1 // pred_region
      %149 = dma.done [#allocation14], 1024
    $region73: #{tpu_custom_call.1} parent=1 // pred_fallthru
      _
    // Predicated region
    $region74: #{tpu_custom_call.1} parent=1 // pred_check
      _
    $region75: #{tpu_custom_call.1} parent=1 // pred_check_branch
      %151 = sbr.rel (0) target = $region77
    $region76: #{tpu_custom_call.1} parent=1 // pred_region
      %152 = dma.done [#allocation14], 1024
    $region77: #{tpu_custom_call.1} parent=1 // pred_fallthru
      _
    %v154 = vld [vmem:[#allocation2] sm:$0xff]
    %v155 = vld [vmem:[#allocation2 + $0x8] sm:$0xff]
    %v156 = vld [vmem:[#allocation2 + $0x10] sm:$0xff]
    %v157 = vld [vmem:[#allocation2 + $0x18] sm:$0xff]
    %v158 = vpack.c.bf16 %v154, %v154
    %v159 = vpack.c.bf16 %v155, %v155
    %v160 = vpack.c.bf16 %v156, %v156
    %v161 = vpack.c.bf16 %v157, %v157
    %v162 = vld [vmem:[#allocation6] sm:$0xff]
    %v163 = vld [vmem:[#allocation6 + $0x8] sm:$0xff]
    %v164 = vld [vmem:[#allocation6 + $0x10] sm:$0xff]
    %v165 = vld [vmem:[#allocation6 + $0x18] sm:$0xff]
    %v166 = vld [vmem:[#allocation6 + $0x20] sm:$0xff]
    %v167 = vld [vmem:[#allocation6 + $0x28] sm:$0xff]
    %v168 = vld [vmem:[#allocation6 + $0x30] sm:$0xff]
    %v169 = vld [vmem:[#allocation6 + $0x38] sm:$0xff]
    %v170 = vld [vmem:[#allocation6 + $0x40] sm:$0xff]
    %v171 = vld [vmem:[#allocation6 + $0x48] sm:$0xff]
    %v172 = vld [vmem:[#allocation6 + $0x50] sm:$0xff]
    %v173 = vld [vmem:[#allocation6 + $0x58] sm:$0xff]
    %v174 = vld [vmem:[#allocation6 + $0x60] sm:$0xff]
    %v175 = vld [vmem:[#allocation6 + $0x68] sm:$0xff]
    %v176 = vld [vmem:[#allocation6 + $0x70] sm:$0xff]
    %v177 = vld [vmem:[#allocation6 + $0x78] sm:$0xff]
    %v178 = vld [vmem:[#allocation6 + $0x80] sm:$0xff]
    %v179 = vld [vmem:[#allocation6 + $0x88] sm:$0xff]
    %v180 = vld [vmem:[#allocation6 + $0x90] sm:$0xff]
    %v181 = vld [vmem:[#allocation6 + $0x98] sm:$0xff]
    %v182 = vld [vmem:[#allocation6 + $0xa0] sm:$0xff]
    %v183 = vld [vmem:[#allocation6 + $0xa8] sm:$0xff]
    %v184 = vld [vmem:[#allocation6 + $0xb0] sm:$0xff]
    %v185 = vld [vmem:[#allocation6 + $0xb8] sm:$0xff]
    %v186 = vld [vmem:[#allocation6 + $0xc0] sm:$0xff]
    %v187 = vld [vmem:[#allocation6 + $0xc8] sm:$0xff]
    %v188 = vld [vmem:[#allocation6 + $0xd0] sm:$0xff]
    %v189 = vld [vmem:[#allocation6 + $0xd8] sm:$0xff]
    %v190 = vld [vmem:[#allocation6 + $0xe0] sm:$0xff]
    %v191 = vld [vmem:[#allocation6 + $0xe8] sm:$0xff]
    %v192 = vld [vmem:[#allocation6 + $0xf0] sm:$0xff]
    %v193 = vld [vmem:[#allocation6 + $0xf8] sm:$0xff]
    %v194 = vld [vmem:[#allocation6 + $0x100] sm:$0xff]
    %v195 = vld [vmem:[#allocation6 + $0x108] sm:$0xff]
    %v196 = vld [vmem:[#allocation6 + $0x110] sm:$0xff]
    %v197 = vld [vmem:[#allocation6 + $0x118] sm:$0xff]
    %v198 = vld [vmem:[#allocation6 + $0x120] sm:$0xff]
    %v199 = vld [vmem:[#allocation6 + $0x128] sm:$0xff]
    %v200 = vld [vmem:[#allocation6 + $0x130] sm:$0xff]
    %v201 = vld [vmem:[#allocation6 + $0x138] sm:$0xff]
    %v202 = vld [vmem:[#allocation6 + $0x140] sm:$0xff]
    %v203 = vld [vmem:[#allocation6 + $0x148] sm:$0xff]
    %v204 = vld [vmem:[#allocation6 + $0x150] sm:$0xff]
    %v205 = vld [vmem:[#allocation6 + $0x158] sm:$0xff]
    %v206 = vld [vmem:[#allocation6 + $0x160] sm:$0xff]
    %v207 = vld [vmem:[#allocation6 + $0x168] sm:$0xff]
    %v208 = vld [vmem:[#allocation6 + $0x170] sm:$0xff]
    %v209 = vld [vmem:[#allocation6 + $0x178] sm:$0xff]
    %v210 = vld [vmem:[#allocation6 + $0x180] sm:$0xff]
    %v211 = vld [vmem:[#allocation6 + $0x188] sm:$0xff]
    %v212 = vld [vmem:[#allocation6 + $0x190] sm:$0xff]
    %v213 = vld [vmem:[#allocation6 + $0x198] sm:$0xff]
    %v214 = vld [vmem:[#allocation6 + $0x1a0] sm:$0xff]
    %v215 = vld [vmem:[#allocation6 + $0x1a8] sm:$0xff]
    %v216 = vld [vmem:[#allocation6 + $0x1b0] sm:$0xff]
    %v217 = vld [vmem:[#allocation6 + $0x1b8] sm:$0xff]
    %v218 = vld [vmem:[#allocation6 + $0x1c0] sm:$0xff]
    %v219 = vld [vmem:[#allocation6 + $0x1c8] sm:$0xff]
    %v220 = vld [vmem:[#allocation6 + $0x1d0] sm:$0xff]
    %v221 = vld [vmem:[#allocation6 + $0x1d8] sm:$0xff]
    %v222 = vld [vmem:[#allocation6 + $0x1e0] sm:$0xff]
    %v223 = vld [vmem:[#allocation6 + $0x1e8] sm:$0xff]
    %v224 = vld [vmem:[#allocation6 + $0x1f0] sm:$0xff]
    %v225 = vld [vmem:[#allocation6 + $0x1f8] sm:$0xff]
    %v226 = vld [vmem:[#allocation4] sm:$0xff]
    %v227 = vld [vmem:[#allocation4 + $0x8] sm:$0xff]
    %v228 = vld [vmem:[#allocation4 + $0x10] sm:$0xff]
    %v229 = vld [vmem:[#allocation4 + $0x18] sm:$0xff]
    %v230 = vld [vmem:[#allocation4 + $0x20] sm:$0xff]
    %v231 = vld [vmem:[#allocation4 + $0x28] sm:$0xff]
    %v232 = vld [vmem:[#allocation4 + $0x30] sm:$0xff]
    %v233 = vld [vmem:[#allocation4 + $0x38] sm:$0xff]
    %v234 = vpack.c.bf16 %v226, %v226
    %v235 = vpack.c.bf16 %v227, %v227
    %v236 = vpack.c.bf16 %v228, %v228
    %v237 = vpack.c.bf16 %v229, %v229
    %v238 = vpack.c.bf16 %v230, %v230
    %v239 = vpack.c.bf16 %v231, %v231
    %v240 = vpack.c.bf16 %v232, %v232
    %v241 = vpack.c.bf16 %v233, %v233
    %v242 = vld [vmem:[#allocation7] sm:$0xff]
    %v243 = vld [vmem:[#allocation7 + $0x8] sm:$0xff]
    %v244 = vld [vmem:[#allocation7 + $0x10] sm:$0xff]
    %v245 = vld [vmem:[#allocation7 + $0x18] sm:$0xff]
    %v246 = vld [vmem:[#allocation7 + $0x20] sm:$0xff]
    %v247 = vld [vmem:[#allocation7 + $0x28] sm:$0xff]
    %v248 = vld [vmem:[#allocation7 + $0x30] sm:$0xff]
    %v249 = vld [vmem:[#allocation7 + $0x38] sm:$0xff]
    %v250 = vld [vmem:[#allocation7 + $0x40] sm:$0xff]
    %v251 = vld [vmem:[#allocation7 + $0x48] sm:$0xff]
    %v252 = vld [vmem:[#allocation7 + $0x50] sm:$0xff]
    %v253 = vld [vmem:[#allocation7 + $0x58] sm:$0xff]
    %v254 = vld [vmem:[#allocation7 + $0x60] sm:$0xff]
    %v255 = vld [vmem:[#allocation7 + $0x68] sm:$0xff]
    %v256 = vld [vmem:[#allocation7 + $0x70] sm:$0xff]
    %v257 = vld [vmem:[#allocation7 + $0x78] sm:$0xff]
    %v258 = vld [vmem:[#allocation7 + $0x80] sm:$0xff]
    %v259 = vld [vmem:[#allocation7 + $0x88] sm:$0xff]
    %v260 = vld [vmem:[#allocation7 + $0x90] sm:$0xff]
    %v261 = vld [vmem:[#allocation7 + $0x98] sm:$0xff]
    %v262 = vld [vmem:[#allocation7 + $0xa0] sm:$0xff]
    %v263 = vld [vmem:[#allocation7 + $0xa8] sm:$0xff]
    %v264 = vld [vmem:[#allocation7 + $0xb0] sm:$0xff]
    %v265 = vld [vmem:[#allocation7 + $0xb8] sm:$0xff]
    %v266 = vld [vmem:[#allocation7 + $0xc0] sm:$0xff]
    %v267 = vld [vmem:[#allocation7 + $0xc8] sm:$0xff]
    %v268 = vld [vmem:[#allocation7 + $0xd0] sm:$0xff]
    %v269 = vld [vmem:[#allocation7 + $0xd8] sm:$0xff]
    %v270 = vld [vmem:[#allocation7 + $0xe0] sm:$0xff]
    %v271 = vld [vmem:[#allocation7 + $0xe8] sm:$0xff]
    %v272 = vld [vmem:[#allocation7 + $0xf0] sm:$0xff]
    %v273 = vld [vmem:[#allocation7 + $0xf8] sm:$0xff]
    %v274 = vld [vmem:[#allocation7 + $0x100] sm:$0xff]
    %v275 = vld [vmem:[#allocation7 + $0x108] sm:$0xff]
    %v276 = vld [vmem:[#allocation7 + $0x110] sm:$0xff]
    %v277 = vld [vmem:[#allocation7 + $0x118] sm:$0xff]
    %v278 = vld [vmem:[#allocation7 + $0x120] sm:$0xff]
    %v279 = vld [vmem:[#allocation7 + $0x128] sm:$0xff]
    %v280 = vld [vmem:[#allocation7 + $0x130] sm:$0xff]
    %v281 = vld [vmem:[#allocation7 + $0x138] sm:$0xff]
    %v282 = vld [vmem:[#allocation7 + $0x140] sm:$0xff]
    %v283 = vld [vmem:[#allocation7 + $0x148] sm:$0xff]
    %v284 = vld [vmem:[#allocation7 + $0x150] sm:$0xff]
    %v285 = vld [vmem:[#allocation7 + $0x158] sm:$0xff]
    %v286 = vld [vmem:[#allocation7 + $0x160] sm:$0xff]
    %v287 = vld [vmem:[#allocation7 + $0x168] sm:$0xff]
    %v288 = vld [vmem:[#allocation7 + $0x170] sm:$0xff]
    %v289 = vld [vmem:[#allocation7 + $0x178] sm:$0xff]
    %v290 = vld [vmem:[#allocation7 + $0x180] sm:$0xff]
    %v291 = vld [vmem:[#allocation7 + $0x188] sm:$0xff]
    %v292 = vld [vmem:[#allocation7 + $0x190] sm:$0xff]
    %v293 = vld [vmem:[#allocation7 + $0x198] sm:$0xff]
    %v294 = vld [vmem:[#allocation7 + $0x1a0] sm:$0xff]
    %v295 = vld [vmem:[#allocation7 + $0x1a8] sm:$0xff]
    %v296 = vld [vmem:[#allocation7 + $0x1b0] sm:$0xff]
    %v297 = vld [vmem:[#allocation7 + $0x1b8] sm:$0xff]
    %v298 = vld [vmem:[#allocation7 + $0x1c0] sm:$0xff]
    %v299 = vld [vmem:[#allocation7 + $0x1c8] sm:$0xff]
    %v300 = vld [vmem:[#allocation7 + $0x1d0] sm:$0xff]
    %v301 = vld [vmem:[#allocation7 + $0x1d8] sm:$0xff]
    %v302 = vld [vmem:[#allocation7 + $0x1e0] sm:$0xff]
    %v303 = vld [vmem:[#allocation7 + $0x1e8] sm:$0xff]
    %v304 = vld [vmem:[#allocation7 + $0x1f0] sm:$0xff]
    %v305 = vld [vmem:[#allocation7 + $0x1f8] sm:$0xff]
    %v306 = vld [vmem:[#allocation7 + $0x200] sm:$0xff]
    %v307 = vld [vmem:[#allocation7 + $0x208] sm:$0xff]
    %v308 = vld [vmem:[#allocation7 + $0x210] sm:$0xff]
    %v309 = vld [vmem:[#allocation7 + $0x218] sm:$0xff]
    %v310 = vld [vmem:[#allocation7 + $0x220] sm:$0xff]
    %v311 = vld [vmem:[#allocation7 + $0x228] sm:$0xff]
    %v312 = vld [vmem:[#allocation7 + $0x230] sm:$0xff]
    %v313 = vld [vmem:[#allocation7 + $0x238] sm:$0xff]
    %v314 = vld [vmem:[#allocation7 + $0x240] sm:$0xff]
    %v315 = vld [vmem:[#allocation7 + $0x248] sm:$0xff]
    %v316 = vld [vmem:[#allocation7 + $0x250] sm:$0xff]
    %v317 = vld [vmem:[#allocation7 + $0x258] sm:$0xff]
    %v318 = vld [vmem:[#allocation7 + $0x260] sm:$0xff]
    %v319 = vld [vmem:[#allocation7 + $0x268] sm:$0xff]
    %v320 = vld [vmem:[#allocation7 + $0x270] sm:$0xff]
    %v321 = vld [vmem:[#allocation7 + $0x278] sm:$0xff]
    %v322 = vld [vmem:[#allocation7 + $0x280] sm:$0xff]
    %v323 = vld [vmem:[#allocation7 + $0x288] sm:$0xff]
    %v324 = vld [vmem:[#allocation7 + $0x290] sm:$0xff]
    %v325 = vld [vmem:[#allocation7 + $0x298] sm:$0xff]
    %v326 = vld [vmem:[#allocation7 + $0x2a0] sm:$0xff]
    %v327 = vld [vmem:[#allocation7 + $0x2a8] sm:$0xff]
    %v328 = vld [vmem:[#allocation7 + $0x2b0] sm:$0xff]
    %v329 = vld [vmem:[#allocation7 + $0x2b8] sm:$0xff]
    %v330 = vld [vmem:[#allocation7 + $0x2c0] sm:$0xff]
    %v331 = vld [vmem:[#allocation7 + $0x2c8] sm:$0xff]
    %v332 = vld [vmem:[#allocation7 + $0x2d0] sm:$0xff]
    %v333 = vld [vmem:[#allocation7 + $0x2d8] sm:$0xff]
    %v334 = vld [vmem:[#allocation7 + $0x2e0] sm:$0xff]
    %v335 = vld [vmem:[#allocation7 + $0x2e8] sm:$0xff]
    %v336 = vld [vmem:[#allocation7 + $0x2f0] sm:$0xff]
    %v337 = vld [vmem:[#allocation7 + $0x2f8] sm:$0xff]
    %v338 = vld [vmem:[#allocation7 + $0x300] sm:$0xff]
    %v339 = vld [vmem:[#allocation7 + $0x308] sm:$0xff]
    %v340 = vld [vmem:[#allocation7 + $0x310] sm:$0xff]
    %v341 = vld [vmem:[#allocation7 + $0x318] sm:$0xff]
    %v342 = vld [vmem:[#allocation7 + $0x320] sm:$0xff]
    %v343 = vld [vmem:[#allocation7 + $0x328] sm:$0xff]
    %v344 = vld [vmem:[#allocation7 + $0x330] sm:$0xff]
    %v345 = vld [vmem:[#allocation7 + $0x338] sm:$0xff]
    %v346 = vld [vmem:[#allocation7 + $0x340] sm:$0xff]
    %v347 = vld [vmem:[#allocation7 + $0x348] sm:$0xff]
    %v348 = vld [vmem:[#allocation7 + $0x350] sm:$0xff]
    %v349 = vld [vmem:[#allocation7 + $0x358] sm:$0xff]
    %v350 = vld [vmem:[#allocation7 + $0x360] sm:$0xff]
    %v351 = vld [vmem:[#allocation7 + $0x368] sm:$0xff]
    %v352 = vld [vmem:[#allocation7 + $0x370] sm:$0xff]
    %v353 = vld [vmem:[#allocation7 + $0x378] sm:$0xff]
    %v354 = vld [vmem:[#allocation7 + $0x380] sm:$0xff]
    %v355 = vld [vmem:[#allocation7 + $0x388] sm:$0xff]
    %v356 = vld [vmem:[#allocation7 + $0x390] sm:$0xff]
    %v357 = vld [vmem:[#allocation7 + $0x398] sm:$0xff]
    %v358 = vld [vmem:[#allocation7 + $0x3a0] sm:$0xff]
    %v359 = vld [vmem:[#allocation7 + $0x3a8] sm:$0xff]
    %v360 = vld [vmem:[#allocation7 + $0x3b0] sm:$0xff]
    %v361 = vld [vmem:[#allocation7 + $0x3b8] sm:$0xff]
    %v362 = vld [vmem:[#allocation7 + $0x3c0] sm:$0xff]
    %v363 = vld [vmem:[#allocation7 + $0x3c8] sm:$0xff]
    %v364 = vld [vmem:[#allocation7 + $0x3d0] sm:$0xff]
    %v365 = vld [vmem:[#allocation7 + $0x3d8] sm:$0xff]
    %v366 = vld [vmem:[#allocation7 + $0x3e0] sm:$0xff]
    %v492 = vunpack.c.l.b16 %v242
    %v493 = vunpack.c.h.b16 %v242
    %v494 = vunpack.c.l.b16 %v243
    %v495 = vunpack.c.h.b16 %v243
    %v496 = vunpack.c.l.b16 %v244
    %v497 = vunpack.c.h.b16 %v244
    %v498 = vunpack.c.l.b16 %v245
    %v499 = vunpack.c.h.b16 %v245
    %v500 = vunpack.c.l.b16 %v246
    %v501 = vunpack.c.h.b16 %v246
    %v502 = vunpack.c.l.b16 %v247
    %v503 = vunpack.c.h.b16 %v247
    %v504 = vunpack.c.l.b16 %v248
    %v505 = vunpack.c.h.b16 %v248
    %v506 = vunpack.c.l.b16 %v249
    %v507 = vunpack.c.h.b16 %v249
    %v508 = vunpack.c.l.b16 %v250
    %v509 = vunpack.c.h.b16 %v250
    %v510 = vunpack.c.l.b16 %v251
    %v511 = vunpack.c.h.b16 %v251
    %v512 = vunpack.c.l.b16 %v252
    %v513 = vunpack.c.h.b16 %v252
    %v514 = vunpack.c.l.b16 %v253
    %v515 = vunpack.c.h.b16 %v253
    %v516 = vunpack.c.l.b16 %v254
    %v517 = vunpack.c.h.b16 %v254
    %v518 = vunpack.c.l.b16 %v255
    %v519 = vunpack.c.h.b16 %v255
    %v520 = vunpack.c.l.b16 %v256
    %v521 = vunpack.c.h.b16 %v256
    %v522 = vunpack.c.l.b16 %v257
    %v523 = vunpack.c.h.b16 %v257
    %v524 = vunpack.c.l.b16 %v258
    %v525 = vunpack.c.h.b16 %v258
    %v526 = vunpack.c.l.b16 %v259
    %v527 = vunpack.c.h.b16 %v259
    %v528 = vunpack.c.l.b16 %v260
    %v529 = vunpack.c.h.b16 %v260
    %v530 = vunpack.c.l.b16 %v261
    %v531 = vunpack.c.h.b16 %v261
    %v532 = vunpack.c.l.b16 %v262
    %v533 = vunpack.c.h.b16 %v262
    %v534 = vunpack.c.l.b16 %v263
    %v535 = vunpack.c.h.b16 %v263
    %v536 = vunpack.c.l.b16 %v264
    %v537 = vunpack.c.h.b16 %v264
    %v538 = vunpack.c.l.b16 %v265
    %v539 = vunpack.c.h.b16 %v265
    %v540 = vunpack.c.l.b16 %v266
    %v541 = vunpack.c.h.b16 %v266
    %v542 = vunpack.c.l.b16 %v267
    %v543 = vunpack.c.h.b16 %v267
    %v544 = vunpack.c.l.b16 %v268
    %v545 = vunpack.c.h.b16 %v268
    %v546 = vunpack.c.l.b16 %v269
    %v547 = vunpack.c.h.b16 %v269
    %v548 = vunpack.c.l.b16 %v270
    %v549 = vunpack.c.h.b16 %v270
    %v550 = vunpack.c.l.b16 %v271
    %v551 = vunpack.c.h.b16 %v271
    %v552 = vunpack.c.l.b16 %v272
    %v553 = vunpack.c.h.b16 %v272
    %v554 = vunpack.c.l.b16 %v273
    %v555 = vunpack.c.h.b16 %v273
    %v556 = vunpack.c.l.b16 %v274
    %v557 = vunpack.c.h.b16 %v274
    %v558 = vunpack.c.l.b16 %v275
    %v559 = vunpack.c.h.b16 %v275
    %v560 = vunpack.c.l.b16 %v276
    %v561 = vunpack.c.h.b16 %v276
    %v562 = vunpack.c.l.b16 %v277
    %v563 = vunpack.c.h.b16 %v277
    %v564 = vunpack.c.l.b16 %v278
    %v565 = vunpack.c.h.b16 %v278
    %v566 = vunpack.c.l.b16 %v279
    %v567 = vunpack.c.h.b16 %v279
    %v568 = vunpack.c.l.b16 %v280
    %v569 = vunpack.c.h.b16 %v280
    %v570 = vunpack.c.l.b16 %v281
    %v571 = vunpack.c.h.b16 %v281
    %v572 = vunpack.c.l.b16 %v282
    %v573 = vunpack.c.h.b16 %v282
    %v574 = vunpack.c.l.b16 %v283
    %v575 = vunpack.c.h.b16 %v283
    %v576 = vunpack.c.l.b16 %v284
    %v577 = vunpack.c.h.b16 %v284
    %v578 = vunpack.c.l.b16 %v285
    %v579 = vunpack.c.h.b16 %v285
    %v580 = vunpack.c.l.b16 %v286
    %v581 = vunpack.c.h.b16 %v286
    %v582 = vunpack.c.l.b16 %v287
    %v583 = vunpack.c.h.b16 %v287
    %v584 = vunpack.c.l.b16 %v288
    %v585 = vunpack.c.h.b16 %v288
    %v586 = vunpack.c.l.b16 %v289
    %v587 = vunpack.c.h.b16 %v289
    %v588 = vunpack.c.l.b16 %v290
    %v589 = vunpack.c.h.b16 %v290
    %v590 = vunpack.c.l.b16 %v291
    %v591 = vunpack.c.h.b16 %v291
    %v592 = vunpack.c.l.b16 %v292
    %v593 = vunpack.c.h.b16 %v292
    %v594 = vunpack.c.l.b16 %v293
    %v595 = vunpack.c.h.b16 %v293
    %v596 = vunpack.c.l.b16 %v294
    %v597 = vunpack.c.h.b16 %v294
    %v598 = vunpack.c.l.b16 %v295
    %v599 = vunpack.c.h.b16 %v295
    %v600 = vunpack.c.l.b16 %v296
    %v601 = vunpack.c.h.b16 %v296
    %v602 = vunpack.c.l.b16 %v297
    %v603 = vunpack.c.h.b16 %v297
    %v604 = vunpack.c.l.b16 %v298
    %v605 = vunpack.c.h.b16 %v298
    %v606 = vunpack.c.l.b16 %v299
    %v607 = vunpack.c.h.b16 %v299
    %v608 = vunpack.c.l.b16 %v300
    %v609 = vunpack.c.h.b16 %v300
    %v610 = vunpack.c.l.b16 %v301
    %v611 = vunpack.c.h.b16 %v301
    %v612 = vunpack.c.l.b16 %v302
    %v613 = vunpack.c.h.b16 %v302
    %v614 = vunpack.c.l.b16 %v303
    %v615 = vunpack.c.h.b16 %v303
    %v616 = vunpack.c.l.b16 %v304
    %v617 = vunpack.c.h.b16 %v304
    %v618 = vunpack.c.l.b16 %v305
    %v619 = vunpack.c.h.b16 %v305
    %v620 = vunpack.c.l.b16 %v306
    %v621 = vunpack.c.h.b16 %v306
    %v622 = vunpack.c.l.b16 %v307
    %v623 = vunpack.c.h.b16 %v307
    %v624 = vunpack.c.l.b16 %v308
    %v625 = vunpack.c.h.b16 %v308
    %v626 = vunpack.c.l.b16 %v309
    %v627 = vunpack.c.h.b16 %v309
    %v628 = vunpack.c.l.b16 %v310
    %v629 = vunpack.c.h.b16 %v310
    %v630 = vunpack.c.l.b16 %v311
    %v631 = vunpack.c.h.b16 %v311
    %v632 = vunpack.c.l.b16 %v312
    %v633 = vunpack.c.h.b16 %v312
    %v634 = vunpack.c.l.b16 %v313
    %v635 = vunpack.c.h.b16 %v313
    %v636 = vunpack.c.l.b16 %v314
    %v637 = vunpack.c.h.b16 %v314
    %v638 = vunpack.c.l.b16 %v315
    %v639 = vunpack.c.h.b16 %v315
    %v640 = vunpack.c.l.b16 %v316
    %v641 = vunpack.c.h.b16 %v316
    %v642 = vunpack.c.l.b16 %v317
    %v643 = vunpack.c.h.b16 %v317
    %v644 = vunpack.c.l.b16 %v318
    %v645 = vunpack.c.h.b16 %v318
    %v646 = vunpack.c.l.b16 %v319
    %v647 = vunpack.c.h.b16 %v319
    %v648 = vunpack.c.l.b16 %v320
    %v649 = vunpack.c.h.b16 %v320
    %v650 = vunpack.c.l.b16 %v321
    %v651 = vunpack.c.h.b16 %v321
    %v652 = vunpack.c.l.b16 %v322
    %v653 = vunpack.c.h.b16 %v322
    %v654 = vunpack.c.l.b16 %v323
    %v655 = vunpack.c.h.b16 %v323
    %v656 = vunpack.c.l.b16 %v324
    %v657 = vunpack.c.h.b16 %v324
    %v658 = vunpack.c.l.b16 %v325
    %v659 = vunpack.c.h.b16 %v325
    %v660 = vunpack.c.l.b16 %v326
    %v661 = vunpack.c.h.b16 %v326
    %v662 = vunpack.c.l.b16 %v327
    %v663 = vunpack.c.h.b16 %v327
    %v664 = vunpack.c.l.b16 %v328
    %v665 = vunpack.c.h.b16 %v328
    %v666 = vunpack.c.l.b16 %v329
    %v667 = vunpack.c.h.b16 %v329
    %v668 = vunpack.c.l.b16 %v330
    %v669 = vunpack.c.h.b16 %v330
    %v670 = vunpack.c.l.b16 %v331
    %v671 = vunpack.c.h.b16 %v331
    %v672 = vunpack.c.l.b16 %v332
    %v673 = vunpack.c.h.b16 %v332
    %v674 = vunpack.c.l.b16 %v333
    %v675 = vunpack.c.h.b16 %v333
    %v676 = vunpack.c.l.b16 %v334
    %v677 = vunpack.c.h.b16 %v334
    %v678 = vunpack.c.l.b16 %v335
    %v679 = vunpack.c.h.b16 %v335
    %v680 = vunpack.c.l.b16 %v336
    %v681 = vunpack.c.h.b16 %v336
    %v682 = vunpack.c.l.b16 %v337
    %v683 = vunpack.c.h.b16 %v337
    %v684 = vunpack.c.l.b16 %v338
    %v685 = vunpack.c.h.b16 %v338
    %v686 = vunpack.c.l.b16 %v339
    %v687 = vunpack.c.h.b16 %v339
    %v688 = vunpack.c.l.b16 %v340
    %v689 = vunpack.c.h.b16 %v340
    %v690 = vunpack.c.l.b16 %v341
    %v691 = vunpack.c.h.b16 %v341
    %v692 = vunpack.c.l.b16 %v342
    %v693 = vunpack.c.h.b16 %v342
    %v694 = vunpack.c.l.b16 %v343
    %v695 = vunpack.c.h.b16 %v343
    %v696 = vunpack.c.l.b16 %v344
    %v697 = vunpack.c.h.b16 %v344
    %v698 = vunpack.c.l.b16 %v345
    %v699 = vunpack.c.h.b16 %v345
    %v700 = vunpack.c.l.b16 %v346
    %v701 = vunpack.c.h.b16 %v346
    %v702 = vunpack.c.l.b16 %v347
    %v703 = vunpack.c.h.b16 %v347
    %v704 = vunpack.c.l.b16 %v348
    %v705 = vunpack.c.h.b16 %v348
    %v706 = vunpack.c.l.b16 %v349
    %v707 = vunpack.c.h.b16 %v349
    %v708 = vunpack.c.l.b16 %v350
    %v709 = vunpack.c.h.b16 %v350
    %v710 = vunpack.c.l.b16 %v351
    %v711 = vunpack.c.h.b16 %v351
    %v712 = vunpack.c.l.b16 %v352
    %v713 = vunpack.c.h.b16 %v352
    %v714 = vunpack.c.l.b16 %v353
    %v715 = vunpack.c.h.b16 %v353
    %v716 = vunpack.c.l.b16 %v354
    %v717 = vunpack.c.h.b16 %v354
    %v718 = vunpack.c.l.b16 %v355
    %v719 = vunpack.c.h.b16 %v355
    %v720 = vunpack.c.l.b16 %v356
    %v721 = vunpack.c.h.b16 %v356
    %v722 = vunpack.c.l.b16 %v357
    %v723 = vunpack.c.h.b16 %v357
    %v724 = vunpack.c.l.b16 %v358
    %v725 = vunpack.c.h.b16 %v358
    %v726 = vunpack.c.l.b16 %v359
    %v727 = vunpack.c.h.b16 %v359
    %v728 = vunpack.c.l.b16 %v360
    %v729 = vunpack.c.h.b16 %v360
    %v730 = vunpack.c.l.b16 %v361
    %v731 = vunpack.c.h.b16 %v361
    %v732 = vunpack.c.l.b16 %v362
    %v733 = vunpack.c.h.b16 %v362
    %v734 = vunpack.c.l.b16 %v363
    %v735 = vunpack.c.h.b16 %v363
    %v736 = vunpack.c.l.b16 %v364
    %v737 = vunpack.c.h.b16 %v364
    %v738 = vunpack.c.l.b16 %v365
    %v739 = vunpack.c.h.b16 %v365
    %v740 = vunpack.c.l.b16 %v366
    %v741 = vunpack.c.h.b16 %v366
    %v742 = vpack.c.b16 %v494, %v492
    %v743 = vpack.c.b16 %v495, %v493
    %v744 = vpack.c.b16 %v498, %v496
    %v745 = vpack.c.b16 %v499, %v497
    %v746 = vpack.c.b16 %v502, %v500
    %v747 = vpack.c.b16 %v503, %v501
    %v748 = vpack.c.b16 %v506, %v504
    %v749 = vpack.c.b16 %v507, %v505
    %v750 = vpack.c.b16 %v510, %v508
    %v751 = vpack.c.b16 %v511, %v509
    %v752 = vpack.c.b16 %v514, %v512
    %v753 = vpack.c.b16 %v515, %v513
    %v754 = vpack.c.b16 %v518, %v516
    %v755 = vpack.c.b16 %v519, %v517
    %v756 = vpack.c.b16 %v522, %v520
    %v757 = vpack.c.b16 %v523, %v521
    %v758 = vpack.c.b16 %v526, %v524
    %v759 = vpack.c.b16 %v527, %v525
    %v760 = vpack.c.b16 %v530, %v528
    %v761 = vpack.c.b16 %v531, %v529
    %v762 = vpack.c.b16 %v534, %v532
    %v763 = vpack.c.b16 %v535, %v533
    %v764 = vpack.c.b16 %v538, %v536
    %v765 = vpack.c.b16 %v539, %v537
    %v766 = vpack.c.b16 %v542, %v540
    %v767 = vpack.c.b16 %v543, %v541
    %v768 = vpack.c.b16 %v546, %v544
    %v769 = vpack.c.b16 %v547, %v545
    %v770 = vpack.c.b16 %v550, %v548
    %v771 = vpack.c.b16 %v551, %v549
    %v772 = vpack.c.b16 %v554, %v552
    %v773 = vpack.c.b16 %v555, %v553
    %v774 = vpack.c.b16 %v558, %v556
    %v775 = vpack.c.b16 %v559, %v557
    %v776 = vpack.c.b16 %v562, %v560
    %v777 = vpack.c.b16 %v563, %v561
    %v778 = vpack.c.b16 %v566, %v564
    %v779 = vpack.c.b16 %v567, %v565
    %v780 = vpack.c.b16 %v570, %v568
    %v781 = vpack.c.b16 %v571, %v569
    %v782 = vpack.c.b16 %v574, %v572
    %v783 = vpack.c.b16 %v575, %v573
    %v784 = vpack.c.b16 %v578, %v576
    %v785 = vpack.c.b16 %v579, %v577
    %v786 = vpack.c.b16 %v582, %v580
    %v787 = vpack.c.b16 %v583, %v581
    %v788 = vpack.c.b16 %v586, %v584
    %v789 = vpack.c.b16 %v587, %v585
    %v790 = vpack.c.b16 %v590, %v588
    %v791 = vpack.c.b16 %v591, %v589
    %v792 = vpack.c.b16 %v594, %v592
    %v793 = vpack.c.b16 %v595, %v593
    %v794 = vpack.c.b16 %v598, %v596
    %v795 = vpack.c.b16 %v599, %v597
    %v796 = vpack.c.b16 %v602, %v600
    %v797 = vpack.c.b16 %v603, %v601
    %v798 = vpack.c.b16 %v606, %v604
    %v799 = vpack.c.b16 %v607, %v605
    %v800 = vpack.c.b16 %v610, %v608
    %v801 = vpack.c.b16 %v611, %v609
    %v802 = vpack.c.b16 %v614, %v612
    %v803 = vpack.c.b16 %v615, %v613
    %v804 = vpack.c.b16 %v618, %v616
    %v805 = vpack.c.b16 %v619, %v617
    %v806 = vpack.c.b16 %v622, %v620
    %v807 = vpack.c.b16 %v623, %v621
    %v808 = vpack.c.b16 %v626, %v624
    %v809 = vpack.c.b16 %v627, %v625
    %v810 = vpack.c.b16 %v630, %v628
    %v811 = vpack.c.b16 %v631, %v629
    %v812 = vpack.c.b16 %v634, %v632
    %v813 = vpack.c.b16 %v635, %v633
    %v814 = vpack.c.b16 %v638, %v636
    %v815 = vpack.c.b16 %v639, %v637
    %v816 = vpack.c.b16 %v642, %v640
    %v817 = vpack.c.b16 %v643, %v641
    %v818 = vpack.c.b16 %v646, %v644
    %v819 = vpack.c.b16 %v647, %v645
    %v820 = vpack.c.b16 %v650, %v648
    %v821 = vpack.c.b16 %v651, %v649
    %v822 = vpack.c.b16 %v654, %v652
    %v823 = vpack.c.b16 %v655, %v653
    %v824 = vpack.c.b16 %v658, %v656
    %v825 = vpack.c.b16 %v659, %v657
    %v826 = vpack.c.b16 %v662, %v660
    %v827 = vpack.c.b16 %v663, %v661
    %v828 = vpack.c.b16 %v666, %v664
    %v829 = vpack.c.b16 %v667, %v665
    %v830 = vpack.c.b16 %v670, %v668
    %v831 = vpack.c.b16 %v671, %v669
    %v832 = vpack.c.b16 %v674, %v672
    %v833 = vpack.c.b16 %v675, %v673
    %v834 = vpack.c.b16 %v678, %v676
    %v835 = vpack.c.b16 %v679, %v677
    %v836 = vpack.c.b16 %v682, %v680
    %v837 = vpack.c.b16 %v683, %v681
    %v838 = vpack.c.b16 %v686, %v684
    %v839 = vpack.c.b16 %v687, %v685
    %v840 = vpack.c.b16 %v690, %v688
    %v841 = vpack.c.b16 %v691, %v689
    %v842 = vpack.c.b16 %v694, %v692
    %v843 = vpack.c.b16 %v695, %v693
    %v844 = vpack.c.b16 %v698, %v696
    %v845 = vpack.c.b16 %v699, %v697
    %v846 = vpack.c.b16 %v702, %v700
    %v847 = vpack.c.b16 %v703, %v701
    %v848 = vpack.c.b16 %v706, %v704
    %v849 = vpack.c.b16 %v707, %v705
    %v850 = vpack.c.b16 %v710, %v708
    %v851 = vpack.c.b16 %v711, %v709
    %v852 = vpack.c.b16 %v714, %v712
    %v853 = vpack.c.b16 %v715, %v713
    %v854 = vpack.c.b16 %v718, %v716
    %v855 = vpack.c.b16 %v719, %v717
    %v856 = vpack.c.b16 %v722, %v720
    %v857 = vpack.c.b16 %v723, %v721
    %v858 = vpack.c.b16 %v726, %v724
    %v859 = vpack.c.b16 %v727, %v725
    %v860 = vpack.c.b16 %v730, %v728
    %v861 = vpack.c.b16 %v731, %v729
    %v862 = vpack.c.b16 %v734, %v732
    %v863 = vpack.c.b16 %v735, %v733
    %v864 = vpack.c.b16 %v738, %v736
    %v865 = vpack.c.b16 %v739, %v737
    %v866 = vpack.c.b16 %v740, %v740
    %v867 = vpack.c.b16 %v741, %v741
    %vm992 = vcmask 850944
    %v994 = vsel %vm992, %v241, 0
    %vm996 = vcmask 1043456
    %v998 = vsel %vm996, %v866, 0
    %v1001 = vsel %vm996, %v867, 0
    %1003 = vmatprep.subr.bf16.mxu0 %v743
    %1004 = vmatpush1.bf16.msra.mxu0 %v742
    %1005 = vmatprep.subr.bf16.mxu0 %v745
    %1006 = vmatpush1.bf16.msra.mxu0 %v744
    %1007 = vmatprep.subr.bf16.mxu0 %v747
    %1008 = vmatpush1.bf16.msra.mxu0 %v746
    %1009 = vmatprep.subr.bf16.mxu0 %v749
    %1010 = vmatpush1.bf16.msra.mxu0 %v748
    %1011 = vmatprep.subr.bf16.mxu0 %v751
    %1012 = vmatpush1.bf16.msra.mxu0 %v750
    %1013 = vmatprep.subr.bf16.mxu0 %v753
    %1014 = vmatpush1.bf16.msra.mxu0 %v752
    %1015 = vmatprep.subr.bf16.mxu0 %v755
    %1016 = vmatpush1.bf16.msra.mxu0 %v754
    %1017 = vmatprep.subr.bf16.mxu0 %v757
    %1018 = vmatpush1.bf16.msra.mxu0 %v756
    %1019 = vmatprep.subr.bf16.mxu0 %v759
    %1020 = vmatpush1.bf16.msra.mxu0 %v758
    %1021 = vmatprep.subr.bf16.mxu0 %v761
    %1022 = vmatpush1.bf16.msra.mxu0 %v760
    %1023 = vmatprep.subr.bf16.mxu0 %v763
    %1024 = vmatpush1.bf16.msra.mxu0 %v762
    %1025 = vmatprep.subr.bf16.mxu0 %v765
    %1026 = vmatpush1.bf16.msra.mxu0 %v764
    %1027 = vmatprep.subr.bf16.mxu0 %v767
    %1028 = vmatpush1.bf16.msra.mxu0 %v766
    %1029 = vmatprep.subr.bf16.mxu0 %v769
    %1030 = vmatpush1.bf16.msra.mxu0 %v768
    %1031 = vmatprep.subr.bf16.mxu0 %v771
    %1032 = vmatpush1.bf16.msra.mxu0 %v770
    %1033 = vmatprep.subr.bf16.mxu0 %v773
    %1034 = vmatpush1.bf16.msra.mxu0 %v772
    %1035 = vmatprep.mubr.bf16.mxu0 %v235
    %1036 = vmatmul.mubr.bf16.gmra.mrb[0].mxu0 %v234
    %v1037 = vpop.f32.mrb[0].mxu0
    %v1038 = vadd.f32 0.0, %v1037
    %v1039 = vpop.f32.mrb[0].mxu0
    %v1040 = vadd.f32 0.0, %v1039
    %v1041 = vpop.f32.mrb[0].mxu0
    %v1042 = vpop.f32.mrb[0].mxu0
    %1043 = vdwg.mxu0
    %1044 = vmatprep.subr.bf16.mxu0 %v775
    %1045 = vmatpush1.bf16.msra.mxu0 %v774
    %1046 = vmatprep.subr.bf16.mxu0 %v777
    %1047 = vmatpush1.bf16.msra.mxu0 %v776
    %1048 = vmatprep.subr.bf16.mxu0 %v779
    %1049 = vmatpush1.bf16.msra.mxu0 %v778
    %1050 = vmatprep.subr.bf16.mxu0 %v781
    %1051 = vmatpush1.bf16.msra.mxu0 %v780
    %1052 = vmatprep.subr.bf16.mxu0 %v783
    %1053 = vmatpush1.bf16.msra.mxu0 %v782
    %1054 = vmatprep.subr.bf16.mxu0 %v785
    %1055 = vmatpush1.bf16.msra.mxu0 %v784
    %1056 = vmatprep.subr.bf16.mxu0 %v787
    %1057 = vmatpush1.bf16.msra.mxu0 %v786
    %1058 = vmatprep.subr.bf16.mxu0 %v789
    %1059 = vmatpush1.bf16.msra.mxu0 %v788
    %1060 = vmatprep.subr.bf16.mxu0 %v791
    %1061 = vmatpush1.bf16.msra.mxu0 %v790
    %1062 = vmatprep.subr.bf16.mxu0 %v793
    %1063 = vmatpush1.bf16.msra.mxu0 %v792
    %1064 = vmatprep.subr.bf16.mxu0 %v795
    %1065 = vmatpush1.bf16.msra.mxu0 %v794
    %1066 = vmatprep.subr.bf16.mxu0 %v797
    %1067 = vmatpush1.bf16.msra.mxu0 %v796
    %1068 = vmatprep.subr.bf16.mxu0 %v799
    %1069 = vmatpush1.bf16.msra.mxu0 %v798
    %1070 = vmatprep.subr.bf16.mxu0 %v801
    %1071 = vmatpush1.bf16.msra.mxu0 %v800
    %1072 = vmatprep.subr.bf16.mxu0 %v803
    %1073 = vmatpush1.bf16.msra.mxu0 %v802
    %1074 = vmatprep.subr.bf16.mxu0 %v805
    %1075 = vmatpush1.bf16.msra.mxu0 %v804
    %1076 = vmatprep.mubr.bf16.mxu0 %v237
    %1077 = vmatmul.mubr.bf16.gmra.mrb[0].mxu0 %v236
    %v1078 = vpop.f32.mrb[0].mxu0
    %v1079 = vadd.f32 %v1038, %v1078
    %v1080 = vpop.f32.mrb[0].mxu0
    %v1081 = vadd.f32 %v1040, %v1080
    %v1082 = vpop.f32.mrb[0].mxu0
    %v1083 = vpop.f32.mrb[0].mxu0
    %1084 = vdwg.mxu0
    %1085 = vmatprep.subr.bf16.mxu0 %v807
    %1086 = vmatpush1.bf16.msra.mxu0 %v806
    %1087 = vmatprep.subr.bf16.mxu0 %v809
    %1088 = vmatpush1.bf16.msra.mxu0 %v808
    %1089 = vmatprep.subr.bf16.mxu0 %v811
    %1090 = vmatpush1.bf16.msra.mxu0 %v810
    %1091 = vmatprep.subr.bf16.mxu0 %v813
    %1092 = vmatpush1.bf16.msra.mxu0 %v812
    %1093 = vmatprep.subr.bf16.mxu0 %v815
    %1094 = vmatpush1.bf16.msra.mxu0 %v814
    %1095 = vmatprep.subr.bf16.mxu0 %v817
    %1096 = vmatpush1.bf16.msra.mxu0 %v816
    %1097 = vmatprep.subr.bf16.mxu0 %v819
    %1098 = vmatpush1.bf16.msra.mxu0 %v818
    %1099 = vmatprep.subr.bf16.mxu0 %v821
    %1100 = vmatpush1.bf16.msra.mxu0 %v820
    %1101 = vmatprep.subr.bf16.mxu0 %v823
    %1102 = vmatpush1.bf16.msra.mxu0 %v822
    %1103 = vmatprep.subr.bf16.mxu0 %v825
    %1104 = vmatpush1.bf16.msra.mxu0 %v824
    %1105 = vmatprep.subr.bf16.mxu0 %v827
    %1106 = vmatpush1.bf16.msra.mxu0 %v826
    %1107 = vmatprep.subr.bf16.mxu0 %v829
    %1108 = vmatpush1.bf16.msra.mxu0 %v828
    %1109 = vmatprep.subr.bf16.mxu0 %v831
    %1110 = vmatpush1.bf16.msra.mxu0 %v830
    %1111 = vmatprep.subr.bf16.mxu0 %v833
    %1112 = vmatpush1.bf16.msra.mxu0 %v832
    %1113 = vmatprep.subr.bf16.mxu0 %v835
    %1114 = vmatpush1.bf16.msra.mxu0 %v834
    %1115 = vmatprep.subr.bf16.mxu0 %v837
    %1116 = vmatpush1.bf16.msra.mxu0 %v836
    %1117 = vmatprep.mubr.bf16.mxu0 %v239
    %1118 = vmatmul.mubr.bf16.gmra.mrb[0].mxu0 %v238
    %v1119 = vpop.f32.mrb[0].mxu0
    %v1120 = vadd.f32 %v1079, %v1119
    %v1121 = vpop.f32.mrb[0].mxu0
    %v1122 = vadd.f32 %v1081, %v1121
    %v1123 = vpop.f32.mrb[0].mxu0
    %v1124 = vpop.f32.mrb[0].mxu0
    %1125 = vdwg.mxu0
    %1126 = vmatprep.subr.bf16.mxu0 %v839
    %1127 = vmatpush1.bf16.msra.mxu0 %v838
    %1128 = vmatprep.subr.bf16.mxu0 %v841
    %1129 = vmatpush1.bf16.msra.mxu0 %v840
    %1130 = vmatprep.subr.bf16.mxu0 %v843
    %1131 = vmatpush1.bf16.msra.mxu0 %v842
    %1132 = vmatprep.subr.bf16.mxu0 %v845
    %1133 = vmatpush1.bf16.msra.mxu0 %v844
    %1134 = vmatprep.subr.bf16.mxu0 %v847
    %1135 = vmatpush1.bf16.msra.mxu0 %v846
    %1136 = vmatprep.subr.bf16.mxu0 %v849
    %1137 = vmatpush1.bf16.msra.mxu0 %v848
    %1138 = vmatprep.subr.bf16.mxu0 %v851
    %1139 = vmatpush1.bf16.msra.mxu0 %v850
    %1140 = vmatprep.subr.bf16.mxu0 %v853
    %1141 = vmatpush1.bf16.msra.mxu0 %v852
    %1142 = vmatprep.subr.bf16.mxu0 %v855
    %1143 = vmatpush1.bf16.msra.mxu0 %v854
    %1144 = vmatprep.subr.bf16.mxu0 %v857
    %1145 = vmatpush1.bf16.msra.mxu0 %v856
    %1146 = vmatprep.subr.bf16.mxu0 %v859
    %1147 = vmatpush1.bf16.msra.mxu0 %v858
    %1148 = vmatprep.subr.bf16.mxu0 %v861
    %1149 = vmatpush1.bf16.msra.mxu0 %v860
    %1150 = vmatprep.subr.bf16.mxu0 %v863
    %1151 = vmatpush1.bf16.msra.mxu0 %v862
    %1152 = vmatprep.subr.bf16.mxu0 %v865
    %1153 = vmatpush1.bf16.msra.mxu0 %v864
    %1154 = vmatprep.subr.bf16.mxu0 %v1001
    %1155 = vmatpush1.bf16.msra.mxu0 %v998
    %1156 = vmatprep.subr.bf16.mxu0 0
    %1157 = vmatpush1.bf16.msra.mxu0 0
    %1158 = vmatprep.mubr.bf16.mxu0 %v994
    %1159 = vmatmul.mubr.bf16.gmra.mrb[0].mxu0 %v240
    %v1160 = vpop.f32.mrb[0].mxu0
    %v1161 = vadd.f32 %v1120, %v1160
    %v1162 = vpop.f32.mrb[0].mxu0
    %v1163 = vadd.f32 %v1122, %v1162
    %v1164 = vpop.f32.mrb[0].mxu0
    %v1165 = vpop.f32.mrb[0].mxu0
    %1166 = vdwg.mxu0
    %v1231 = vunpack.c.l.b16 %v162
    %v1232 = vunpack.c.h.b16 %v162
    %v1233 = vunpack.c.l.b16 %v163
    %v1234 = vunpack.c.h.b16 %v163
    %v1235 = vunpack.c.l.b16 %v164
    %v1236 = vunpack.c.h.b16 %v164
    %v1237 = vunpack.c.l.b16 %v165
    %v1238 = vunpack.c.h.b16 %v165
    %v1239 = vunpack.c.l.b16 %v166
    %v1240 = vunpack.c.h.b16 %v166
    %v1241 = vunpack.c.l.b16 %v167
    %v1242 = vunpack.c.h.b16 %v167
    %v1243 = vunpack.c.l.b16 %v168
    %v1244 = vunpack.c.h.b16 %v168
    %v1245 = vunpack.c.l.b16 %v169
    %v1246 = vunpack.c.h.b16 %v169
    %v1247 = vunpack.c.l.b16 %v170
    %v1248 = vunpack.c.h.b16 %v170
    %v1249 = vunpack.c.l.b16 %v171
    %v1250 = vunpack.c.h.b16 %v171
    %v1251 = vunpack.c.l.b16 %v172
    %v1252 = vunpack.c.h.b16 %v172
    %v1253 = vunpack.c.l.b16 %v173
    %v1254 = vunpack.c.h.b16 %v173
    %v1255 = vunpack.c.l.b16 %v174
    %v1256 = vunpack.c.h.b16 %v174
    %v1257 = vunpack.c.l.b16 %v175
    %v1258 = vunpack.c.h.b16 %v175
    %v1259 = vunpack.c.l.b16 %v176
    %v1260 = vunpack.c.h.b16 %v176
    %v1261 = vunpack.c.l.b16 %v177
    %v1262 = vunpack.c.h.b16 %v177
    %v1263 = vunpack.c.l.b16 %v178
    %v1264 = vunpack.c.h.b16 %v178
    %v1265 = vunpack.c.l.b16 %v179
    %v1266 = vunpack.c.h.b16 %v179
    %v1267 = vunpack.c.l.b16 %v180
    %v1268 = vunpack.c.h.b16 %v180
    %v1269 = vunpack.c.l.b16 %v181
    %v1270 = vunpack.c.h.b16 %v181
    %v1271 = vunpack.c.l.b16 %v182
    %v1272 = vunpack.c.h.b16 %v182
    %v1273 = vunpack.c.l.b16 %v183
    %v1274 = vunpack.c.h.b16 %v183
    %v1275 = vunpack.c.l.b16 %v184
    %v1276 = vunpack.c.h.b16 %v184
    %v1277 = vunpack.c.l.b16 %v185
    %v1278 = vunpack.c.h.b16 %v185
    %v1279 = vunpack.c.l.b16 %v186
    %v1280 = vunpack.c.h.b16 %v186
    %v1281 = vunpack.c.l.b16 %v187
    %v1282 = vunpack.c.h.b16 %v187
    %v1283 = vunpack.c.l.b16 %v188
    %v1284 = vunpack.c.h.b16 %v188
    %v1285 = vunpack.c.l.b16 %v189
    %v1286 = vunpack.c.h.b16 %v189
    %v1287 = vunpack.c.l.b16 %v190
    %v1288 = vunpack.c.h.b16 %v190
    %v1289 = vunpack.c.l.b16 %v191
    %v1290 = vunpack.c.h.b16 %v191
    %v1291 = vunpack.c.l.b16 %v192
    %v1292 = vunpack.c.h.b16 %v192
    %v1293 = vunpack.c.l.b16 %v193
    %v1294 = vunpack.c.h.b16 %v193
    %v1295 = vunpack.c.l.b16 %v194
    %v1296 = vunpack.c.h.b16 %v194
    %v1297 = vunpack.c.l.b16 %v195
    %v1298 = vunpack.c.h.b16 %v195
    %v1299 = vunpack.c.l.b16 %v196
    %v1300 = vunpack.c.h.b16 %v196
    %v1301 = vunpack.c.l.b16 %v197
    %v1302 = vunpack.c.h.b16 %v197
    %v1303 = vunpack.c.l.b16 %v198
    %v1304 = vunpack.c.h.b16 %v198
    %v1305 = vunpack.c.l.b16 %v199
    %v1306 = vunpack.c.h.b16 %v199
    %v1307 = vunpack.c.l.b16 %v200
    %v1308 = vunpack.c.h.b16 %v200
    %v1309 = vunpack.c.l.b16 %v201
    %v1310 = vunpack.c.h.b16 %v201
    %v1311 = vunpack.c.l.b16 %v202
    %v1312 = vunpack.c.h.b16 %v202
    %v1313 = vunpack.c.l.b16 %v203
    %v1314 = vunpack.c.h.b16 %v203
    %v1315 = vunpack.c.l.b16 %v204
    %v1316 = vunpack.c.h.b16 %v204
    %v1317 = vunpack.c.l.b16 %v205
    %v1318 = vunpack.c.h.b16 %v205
    %v1319 = vunpack.c.l.b16 %v206
    %v1320 = vunpack.c.h.b16 %v206
    %v1321 = vunpack.c.l.b16 %v207
    %v1322 = vunpack.c.h.b16 %v207
    %v1323 = vunpack.c.l.b16 %v208
    %v1324 = vunpack.c.h.b16 %v208
    %v1325 = vunpack.c.l.b16 %v209
    %v1326 = vunpack.c.h.b16 %v209
    %v1327 = vunpack.c.l.b16 %v210
    %v1328 = vunpack.c.h.b16 %v210
    %v1329 = vunpack.c.l.b16 %v211
    %v1330 = vunpack.c.h.b16 %v211
    %v1331 = vunpack.c.l.b16 %v212
    %v1332 = vunpack.c.h.b16 %v212
    %v1333 = vunpack.c.l.b16 %v213
    %v1334 = vunpack.c.h.b16 %v213
    %v1335 = vunpack.c.l.b16 %v214
    %v1336 = vunpack.c.h.b16 %v214
    %v1337 = vunpack.c.l.b16 %v215
    %v1338 = vunpack.c.h.b16 %v215
    %v1339 = vunpack.c.l.b16 %v216
    %v1340 = vunpack.c.h.b16 %v216
    %v1341 = vunpack.c.l.b16 %v217
    %v1342 = vunpack.c.h.b16 %v217
    %v1343 = vunpack.c.l.b16 %v218
    %v1344 = vunpack.c.h.b16 %v218
    %v1345 = vunpack.c.l.b16 %v219
    %v1346 = vunpack.c.h.b16 %v219
    %v1347 = vunpack.c.l.b16 %v220
    %v1348 = vunpack.c.h.b16 %v220
    %v1349 = vunpack.c.l.b16 %v221
    %v1350 = vunpack.c.h.b16 %v221
    %v1351 = vunpack.c.l.b16 %v222
    %v1352 = vunpack.c.h.b16 %v222
    %v1353 = vunpack.c.l.b16 %v223
    %v1354 = vunpack.c.h.b16 %v223
    %v1355 = vunpack.c.l.b16 %v224
    %v1356 = vunpack.c.h.b16 %v224
    %v1357 = vunpack.c.l.b16 %v225
    %v1358 = vunpack.c.h.b16 %v225
    %v1359 = vpack.c.b16 %v1233, %v1231
    %v1360 = vpack.c.b16 %v1234, %v1232
    %v1361 = vpack.c.b16 %v1237, %v1235
    %v1362 = vpack.c.b16 %v1238, %v1236
    %v1363 = vpack.c.b16 %v1241, %v1239
    %v1364 = vpack.c.b16 %v1242, %v1240
    %v1365 = vpack.c.b16 %v1245, %v1243
    %v1366 = vpack.c.b16 %v1246, %v1244
    %v1367 = vpack.c.b16 %v1249, %v1247
    %v1368 = vpack.c.b16 %v1250, %v1248
    %v1369 = vpack.c.b16 %v1253, %v1251
    %v1370 = vpack.c.b16 %v1254, %v1252
    %v1371 = vpack.c.b16 %v1257, %v1255
    %v1372 = vpack.c.b16 %v1258, %v1256
    %v1373 = vpack.c.b16 %v1261, %v1259
    %v1374 = vpack.c.b16 %v1262, %v1260
    %v1375 = vpack.c.b16 %v1265, %v1263
    %v1376 = vpack.c.b16 %v1266, %v1264
    %v1377 = vpack.c.b16 %v1269, %v1267
    %v1378 = vpack.c.b16 %v1270, %v1268
    %v1379 = vpack.c.b16 %v1273, %v1271
    %v1380 = vpack.c.b16 %v1274, %v1272
    %v1381 = vpack.c.b16 %v1277, %v1275
    %v1382 = vpack.c.b16 %v1278, %v1276
    %v1383 = vpack.c.b16 %v1281, %v1279
    %v1384 = vpack.c.b16 %v1282, %v1280
    %v1385 = vpack.c.b16 %v1285, %v1283
    %v1386 = vpack.c.b16 %v1286, %v1284
    %v1387 = vpack.c.b16 %v1289, %v1287
    %v1388 = vpack.c.b16 %v1290, %v1288
    %v1389 = vpack.c.b16 %v1293, %v1291
    %v1390 = vpack.c.b16 %v1294, %v1292
    %v1391 = vpack.c.b16 %v1297, %v1295
    %v1392 = vpack.c.b16 %v1298, %v1296
    %v1393 = vpack.c.b16 %v1301, %v1299
    %v1394 = vpack.c.b16 %v1302, %v1300
    %v1395 = vpack.c.b16 %v1305, %v1303
    %v1396 = vpack.c.b16 %v1306, %v1304
    %v1397 = vpack.c.b16 %v1309, %v1307
    %v1398 = vpack.c.b16 %v1310, %v1308
    %v1399 = vpack.c.b16 %v1313, %v1311
    %v1400 = vpack.c.b16 %v1314, %v1312
    %v1401 = vpack.c.b16 %v1317, %v1315
    %v1402 = vpack.c.b16 %v1318, %v1316
    %v1403 = vpack.c.b16 %v1321, %v1319
    %v1404 = vpack.c.b16 %v1322, %v1320
    %v1405 = vpack.c.b16 %v1325, %v1323
    %v1406 = vpack.c.b16 %v1326, %v1324
    %v1407 = vpack.c.b16 %v1329, %v1327
    %v1408 = vpack.c.b16 %v1330, %v1328
    %v1409 = vpack.c.b16 %v1333, %v1331
    %v1410 = vpack.c.b16 %v1334, %v1332
    %v1411 = vpack.c.b16 %v1337, %v1335
    %v1412 = vpack.c.b16 %v1338, %v1336
    %v1413 = vpack.c.b16 %v1341, %v1339
    %v1414 = vpack.c.b16 %v1342, %v1340
    %v1415 = vpack.c.b16 %v1345, %v1343
    %v1416 = vpack.c.b16 %v1346, %v1344
    %v1417 = vpack.c.b16 %v1349, %v1347
    %v1418 = vpack.c.b16 %v1350, %v1348
    %v1419 = vpack.c.b16 %v1353, %v1351
    %v1420 = vpack.c.b16 %v1354, %v1352
    %v1421 = vpack.c.b16 %v1357, %v1355
    %v1422 = vpack.c.b16 %v1358, %v1356
    %1487 = vmatprep.subr.bf16.mxu0 %v1360
    %1488 = vmatpush1.bf16.msra.mxu0 %v1359
    %1489 = vmatprep.subr.bf16.mxu0 %v1362
    %1490 = vmatpush1.bf16.msra.mxu0 %v1361
    %1491 = vmatprep.subr.bf16.mxu0 %v1364
    %1492 = vmatpush1.bf16.msra.mxu0 %v1363
    %1493 = vmatprep.subr.bf16.mxu0 %v1366
    %1494 = vmatpush1.bf16.msra.mxu0 %v1365
    %1495 = vmatprep.subr.bf16.mxu0 %v1368
    %1496 = vmatpush1.bf16.msra.mxu0 %v1367
    %1497 = vmatprep.subr.bf16.mxu0 %v1370
    %1498 = vmatpush1.bf16.msra.mxu0 %v1369
    %1499 = vmatprep.subr.bf16.mxu0 %v1372
    %1500 = vmatpush1.bf16.msra.mxu0 %v1371
    %1501 = vmatprep.subr.bf16.mxu0 %v1374
    %1502 = vmatpush1.bf16.msra.mxu0 %v1373
    %1503 = vmatprep.subr.bf16.mxu0 %v1376
    %1504 = vmatpush1.bf16.msra.mxu0 %v1375
    %1505 = vmatprep.subr.bf16.mxu0 %v1378
    %1506 = vmatpush1.bf16.msra.mxu0 %v1377
    %1507 = vmatprep.subr.bf16.mxu0 %v1380
    %1508 = vmatpush1.bf16.msra.mxu0 %v1379
    %1509 = vmatprep.subr.bf16.mxu0 %v1382
    %1510 = vmatpush1.bf16.msra.mxu0 %v1381
    %1511 = vmatprep.subr.bf16.mxu0 %v1384
    %1512 = vmatpush1.bf16.msra.mxu0 %v1383
    %1513 = vmatprep.subr.bf16.mxu0 %v1386
    %1514 = vmatpush1.bf16.msra.mxu0 %v1385
    %1515 = vmatprep.subr.bf16.mxu0 %v1388
    %1516 = vmatpush1.bf16.msra.mxu0 %v1387
    %1517 = vmatprep.subr.bf16.mxu0 %v1390
    %1518 = vmatpush1.bf16.msra.mxu0 %v1389
    %1519 = vmatprep.mubr.bf16.mxu0 %v159
    %1520 = vmatmul.mubr.bf16.gmra.mrb[0].mxu0 %v158
    %v1521 = vpop.f32.mrb[0].mxu0
    %v1522 = vadd.f32 %v1161, %v1521
    %v1523 = vpop.f32.mrb[0].mxu0
    %v1524 = vadd.f32 %v1163, %v1523
    %v1525 = vpop.f32.mrb[0].mxu0
    %v1526 = vpop.f32.mrb[0].mxu0
    %1527 = vdwg.mxu0
    %1528 = vmatprep.subr.bf16.mxu0 %v1392
    %1529 = vmatpush1.bf16.msra.mxu0 %v1391
    %1530 = vmatprep.subr.bf16.mxu0 %v1394
    %1531 = vmatpush1.bf16.msra.mxu0 %v1393
    %1532 = vmatprep.subr.bf16.mxu0 %v1396
    %1533 = vmatpush1.bf16.msra.mxu0 %v1395
    %1534 = vmatprep.subr.bf16.mxu0 %v1398
    %1535 = vmatpush1.bf16.msra.mxu0 %v1397
    %1536 = vmatprep.subr.bf16.mxu0 %v1400
    %1537 = vmatpush1.bf16.msra.mxu0 %v1399
    %1538 = vmatprep.subr.bf16.mxu0 %v1402
    %1539 = vmatpush1.bf16.msra.mxu0 %v1401
    %1540 = vmatprep.subr.bf16.mxu0 %v1404
    %1541 = vmatpush1.bf16.msra.mxu0 %v1403
    %1542 = vmatprep.subr.bf16.mxu0 %v1406
    %1543 = vmatpush1.bf16.msra.mxu0 %v1405
    %1544 = vmatprep.subr.bf16.mxu0 %v1408
    %1545 = vmatpush1.bf16.msra.mxu0 %v1407
    %1546 = vmatprep.subr.bf16.mxu0 %v1410
    %1547 = vmatpush1.bf16.msra.mxu0 %v1409
    %1548 = vmatprep.subr.bf16.mxu0 %v1412
    %1549 = vmatpush1.bf16.msra.mxu0 %v1411
    %1550 = vmatprep.subr.bf16.mxu0 %v1414
    %1551 = vmatpush1.bf16.msra.mxu0 %v1413
    %1552 = vmatprep.subr.bf16.mxu0 %v1416
    %1553 = vmatpush1.bf16.msra.mxu0 %v1415
    %1554 = vmatprep.subr.bf16.mxu0 %v1418
    %1555 = vmatpush1.bf16.msra.mxu0 %v1417
    %1556 = vmatprep.subr.bf16.mxu0 %v1420
    %1557 = vmatpush1.bf16.msra.mxu0 %v1419
    %1558 = vmatprep.subr.bf16.mxu0 %v1422
    %1559 = vmatpush1.bf16.msra.mxu0 %v1421
    %1560 = vmatprep.mubr.bf16.mxu0 %v161
    %1561 = vmatmul.mubr.bf16.gmra.mrb[0].mxu0 %v160
    %v1562 = vpop.f32.mrb[0].mxu0
    %v1563 = vadd.f32 %v1522, %v1562
    %v1564 = vpop.f32.mrb[0].mxu0
    %v1565 = vadd.f32 %v1524, %v1564
    %v1566 = vpop.f32.mrb[0].mxu0
    %v1567 = vpop.f32.mrb[0].mxu0
    %1568 = vdwg.mxu0
    %v1569 = vld [vmem:[%s9] ss:$8 sm:$0x3]
    %v1571 = vlaneseq
    %v1572 = vshrl.u32 %v1571, 7
    %v1573 = vsub.s32 0, %v1572
    %v1574 = vrot.slane %v1569, %v1573
    %v1575 = vlaneseq
    %v1576 = vshrl.u32 %v1575, 7
    %v1577 = vsub.s32 1, %v1576
    %v1578 = vrot.slane %v1569, %v1577
    %v1581 = vadd.f32 %v1563, %v1574
    %v1582 = vadd.f32 %v1565, %v1578
    %v1583 = vmax.f32 %v1581, 0.0
    %v1584 = vmax.f32 %v1582, 0.0
    %v1585 = vpack.c.bf16 %v1583, %v1583
    %v1586 = vpack.c.bf16 %v1584, %v1584
    %v1587 = vld [vmem:[#allocation9] sm:$0xf]
    %v1588 = vld [vmem:[#allocation9 + $0x4] sm:$0xf]
    %v1589 = vld [vmem:[#allocation9 + $0x8] sm:$0xf]
    %v1590 = vld [vmem:[#allocation9 + $0xc] sm:$0xf]
    %v1591 = vld [vmem:[#allocation9 + $0x10] sm:$0xf]
    %v1592 = vld [vmem:[#allocation9 + $0x14] sm:$0xf]
    %v1593 = vld [vmem:[#allocation9 + $0x18] sm:$0xf]
    %v1594 = vld [vmem:[#allocation9 + $0x1c] sm:$0xf]
    %v1595 = vld [vmem:[#allocation9 + $0x20] sm:$0xf]
    %v1596 = vld [vmem:[#allocation9 + $0x24] sm:$0xf]
    %v1597 = vld [vmem:[#allocation9 + $0x28] sm:$0xf]
    %v1598 = vld [vmem:[#allocation9 + $0x2c] sm:$0xf]
    %v1599 = vld [vmem:[#allocation9 + $0x30] sm:$0xf]
    %v1600 = vld [vmem:[#allocation9 + $0x34] sm:$0xf]
    %v1601 = vld [vmem:[#allocation9 + $0x38] sm:$0xf]
    %v1602 = vld [vmem:[#allocation9 + $0x3c] sm:$0xf]
    %v1603 = vld [vmem:[#allocation9 + $0x40] sm:$0xf]
    %v1604 = vld [vmem:[#allocation9 + $0x44] sm:$0xf]
    %v1605 = vld [vmem:[#allocation9 + $0x48] sm:$0xf]
    %v1606 = vld [vmem:[#allocation9 + $0x4c] sm:$0xf]
    %v1607 = vld [vmem:[#allocation9 + $0x50] sm:$0xf]
    %v1608 = vld [vmem:[#allocation9 + $0x54] sm:$0xf]
    %v1609 = vld [vmem:[#allocation9 + $0x58] sm:$0xf]
    %v1610 = vld [vmem:[#allocation9 + $0x5c] sm:$0xf]
    %v1611 = vld [vmem:[#allocation9 + $0x60] sm:$0xf]
    %v1612 = vld [vmem:[#allocation9 + $0x64] sm:$0xf]
    %v1613 = vld [vmem:[#allocation9 + $0x68] sm:$0xf]
    %v1614 = vld [vmem:[#allocation9 + $0x6c] sm:$0xf]
    %v1615 = vld [vmem:[#allocation9 + $0x70] sm:$0xf]
    %v1616 = vld [vmem:[#allocation9 + $0x74] sm:$0xf]
    %v1617 = vld [vmem:[#allocation9 + $0x78] sm:$0xf]
    %v1618 = vld [vmem:[#allocation9 + $0x7c] sm:$0xf]
    %v1619 = vld [vmem:[%s9 + $0x1] ss:$0 sm:$0xff]
    %v1652 = vunpack.c.l.b16 %v1587
    %v1653 = vunpack.c.l.b16 %v1588
    %v1654 = vunpack.c.l.b16 %v1589
    %v1655 = vunpack.c.l.b16 %v1590
    %v1656 = vunpack.c.l.b16 %v1591
    %v1657 = vunpack.c.l.b16 %v1592
    %v1658 = vunpack.c.l.b16 %v1593
    %v1659 = vunpack.c.l.b16 %v1594
    %v1660 = vunpack.c.l.b16 %v1595
    %v1661 = vunpack.c.l.b16 %v1596
    %v1662 = vunpack.c.l.b16 %v1597
    %v1663 = vunpack.c.l.b16 %v1598
    %v1664 = vunpack.c.l.b16 %v1599
    %v1665 = vunpack.c.l.b16 %v1600
    %v1666 = vunpack.c.l.b16 %v1601
    %v1667 = vunpack.c.l.b16 %v1602
    %v1668 = vunpack.c.l.b16 %v1603
    %v1669 = vunpack.c.l.b16 %v1604
    %v1670 = vunpack.c.l.b16 %v1605
    %v1671 = vunpack.c.l.b16 %v1606
    %v1672 = vunpack.c.l.b16 %v1607
    %v1673 = vunpack.c.l.b16 %v1608
    %v1674 = vunpack.c.l.b16 %v1609
    %v1675 = vunpack.c.l.b16 %v1610
    %v1676 = vunpack.c.l.b16 %v1611
    %v1677 = vunpack.c.l.b16 %v1612
    %v1678 = vunpack.c.l.b16 %v1613
    %v1679 = vunpack.c.l.b16 %v1614
    %v1680 = vunpack.c.l.b16 %v1615
    %v1681 = vunpack.c.l.b16 %v1616
    %v1682 = vunpack.c.l.b16 %v1617
    %v1683 = vunpack.c.l.b16 %v1618
    %v1684 = vpack.c.b16 %v1653, %v1652
    %v1685 = vpack.c.b16 %v1655, %v1654
    %v1686 = vpack.c.b16 %v1657, %v1656
    %v1687 = vpack.c.b16 %v1659, %v1658
    %v1688 = vpack.c.b16 %v1661, %v1660
    %v1689 = vpack.c.b16 %v1663, %v1662
    %v1690 = vpack.c.b16 %v1665, %v1664
    %v1691 = vpack.c.b16 %v1667, %v1666
    %v1692 = vpack.c.b16 %v1669, %v1668
    %v1693 = vpack.c.b16 %v1671, %v1670
    %v1694 = vpack.c.b16 %v1673, %v1672
    %v1695 = vpack.c.b16 %v1675, %v1674
    %v1696 = vpack.c.b16 %v1677, %v1676
    %v1697 = vpack.c.b16 %v1679, %v1678
    %v1698 = vpack.c.b16 %v1681, %v1680
    %v1699 = vpack.c.b16 %v1683, %v1682
    %1716 = vmatprep.subr.bf16.mxu0 0
    %1717 = vmatpush1.bf16.msra.mxu0 %v1684
    %1718 = vmatprep.subr.bf16.mxu0 0
    %1719 = vmatpush1.bf16.msra.mxu0 %v1685
    %1720 = vmatprep.subr.bf16.mxu0 0
    %1721 = vmatpush1.bf16.msra.mxu0 %v1686
    %1722 = vmatprep.subr.bf16.mxu0 0
    %1723 = vmatpush1.bf16.msra.mxu0 %v1687
    %1724 = vmatprep.subr.bf16.mxu0 0
    %1725 = vmatpush1.bf16.msra.mxu0 %v1688
    %1726 = vmatprep.subr.bf16.mxu0 0
    %1727 = vmatpush1.bf16.msra.mxu0 %v1689
    %1728 = vmatprep.subr.bf16.mxu0 0
    %1729 = vmatpush1.bf16.msra.mxu0 %v1690
    %1730 = vmatprep.subr.bf16.mxu0 0
    %1731 = vmatpush1.bf16.msra.mxu0 %v1691
    %1732 = vmatprep.subr.bf16.mxu0 0
    %1733 = vmatpush1.bf16.msra.mxu0 %v1692
    %1734 = vmatprep.subr.bf16.mxu0 0
    %1735 = vmatpush1.bf16.msra.mxu0 %v1693
    %1736 = vmatprep.subr.bf16.mxu0 0
    %1737 = vmatpush1.bf16.msra.mxu0 %v1694
    %1738 = vmatprep.subr.bf16.mxu0 0
    %1739 = vmatpush1.bf16.msra.mxu0 %v1695
    %1740 = vmatprep.subr.bf16.mxu0 0
    %1741 = vmatpush1.bf16.msra.mxu0 %v1696
    %1742 = vmatprep.subr.bf16.mxu0 0
    %1743 = vmatpush1.bf16.msra.mxu0 %v1697
    %1744 = vmatprep.subr.bf16.mxu0 0
    %1745 = vmatpush1.bf16.msra.mxu0 %v1698
    %1746 = vmatprep.subr.bf16.mxu0 0
    %1747 = vmatpush1.bf16.msra.mxu0 %v1699
    %1748 = vmatprep.mubr.bf16.mxu0 %v1586
    %1749 = vmatmul.mubr.bf16.gmra.mrb[0].mxu0 %v1585
    %v1750 = vpop.f32.mrb[0].mxu0
    %v1751 = vadd.f32 %v1619, %v1750
    %v1752 = vpop.f32.mrb[0].mxu0
    %v1753 = vpop.f32.mrb[0].mxu0
    %v1754 = vpop.f32.mrb[0].mxu0
    %1755 = vdwg.mxu0
    %v1756 = vmax.f32 %v1751, 0.0
    %v1757 = vpack.c.bf16 %v1756, %v1756
    %v1758 = vld [vmem:[#allocation10] sm:$0xf]
    %v1759 = vld [vmem:[#allocation10 + $0x4] sm:$0xf]
    %v1760 = vld [vmem:[#allocation10 + $0x8] sm:$0xf]
    %v1761 = vld [vmem:[#allocation10 + $0xc] sm:$0xf]
    %v1762 = vld [vmem:[#allocation10 + $0x10] sm:$0xf]
    %v1763 = vld [vmem:[#allocation10 + $0x14] sm:$0xf]
    %v1764 = vld [vmem:[#allocation10 + $0x18] sm:$0xf]
    %v1765 = vld [vmem:[#allocation10 + $0x1c] sm:$0xf]
    %v1766 = vld [vmem:[#allocation10 + $0x20] sm:$0xf]
    %v1767 = vld [vmem:[#allocation10 + $0x24] sm:$0xf]
    %v1768 = vld [vmem:[#allocation10 + $0x28] sm:$0xf]
    %v1769 = vld [vmem:[#allocation10 + $0x2c] sm:$0xf]
    %v1770 = vld [vmem:[#allocation10 + $0x30] sm:$0xf]
    %v1771 = vld [vmem:[#allocation10 + $0x34] sm:$0xf]
    %v1772 = vld [vmem:[#allocation10 + $0x38] sm:$0xf]
    %v1773 = vld [vmem:[#allocation10 + $0x3c] sm:$0xf]
    %v1774 = vld [vmem:[%s9 + $0x2] ss:$0 sm:$0xff]
    %v1791 = vunpack.c.l.b16 %v1758
    %v1792 = vunpack.c.l.b16 %v1759
    %v1793 = vunpack.c.l.b16 %v1760
    %v1794 = vunpack.c.l.b16 %v1761
    %v1795 = vunpack.c.l.b16 %v1762
    %v1796 = vunpack.c.l.b16 %v1763
    %v1797 = vunpack.c.l.b16 %v1764
    %v1798 = vunpack.c.l.b16 %v1765
    %v1799 = vunpack.c.l.b16 %v1766
    %v1800 = vunpack.c.l.b16 %v1767
    %v1801 = vunpack.c.l.b16 %v1768
    %v1802 = vunpack.c.l.b16 %v1769
    %v1803 = vunpack.c.l.b16 %v1770
    %v1804 = vunpack.c.l.b16 %v1771
    %v1805 = vunpack.c.l.b16 %v1772
    %v1806 = vunpack.c.l.b16 %v1773
    %v1807 = vpack.c.b16 %v1792, %v1791
    %v1808 = vpack.c.b16 %v1794, %v1793
    %v1809 = vpack.c.b16 %v1796, %v1795
    %v1810 = vpack.c.b16 %v1798, %v1797
    %v1811 = vpack.c.b16 %v1800, %v1799
    %v1812 = vpack.c.b16 %v1802, %v1801
    %v1813 = vpack.c.b16 %v1804, %v1803
    %v1814 = vpack.c.b16 %v1806, %v1805
    %1823 = vmatprep.subr.bf16.mxu0 0
    %1824 = vmatpush1.bf16.msra.mxu0 %v1807
    %1825 = vmatprep.subr.bf16.mxu0 0
    %1826 = vmatpush1.bf16.msra.mxu0 %v1808
    %1827 = vmatprep.subr.bf16.mxu0 0
    %1828 = vmatpush1.bf16.msra.mxu0 %v1809
    %1829 = vmatprep.subr.bf16.mxu0 0
    %1830 = vmatpush1.bf16.msra.mxu0 %v1810
    %1831 = vmatprep.subr.bf16.mxu0 0
    %1832 = vmatpush1.bf16.msra.mxu0 %v1811
    %1833 = vmatprep.subr.bf16.mxu0 0
    %1834 = vmatpush1.bf16.msra.mxu0 %v1812
    %1835 = vmatprep.subr.bf16.mxu0 0
    %1836 = vmatpush1.bf16.msra.mxu0 %v1813
    %1837 = vmatprep.subr.bf16.mxu0 0
    %1838 = vmatpush1.bf16.msra.mxu0 %v1814
    %1839 = vmatprep.subr.bf16.mxu0 0
    %1840 = vmatpush1.bf16.msra.mxu0 0
    %1841 = vmatprep.subr.bf16.mxu0 0
    %1842 = vmatpush1.bf16.msra.mxu0 0
    %1843 = vmatprep.subr.bf16.mxu0 0
    %1844 = vmatpush1.bf16.msra.mxu0 0
    %1845 = vmatprep.subr.bf16.mxu0 0
    %1846 = vmatpush1.bf16.msra.mxu0 0
    %1847 = vmatprep.subr.bf16.mxu0 0
    %1848 = vmatpush1.bf16.msra.mxu0 0
    %1849 = vmatprep.subr.bf16.mxu0 0
    %1850 = vmatpush1.bf16.msra.mxu0 0
    %1851 = vmatprep.subr.bf16.mxu0 0
    %1852 = vmatpush1.bf16.msra.mxu0 0
    %1853 = vmatprep.subr.bf16.mxu0 0
    %1854 = vmatpush1.bf16.msra.mxu0 0
    %1855 = vmatprep.mubr.bf16.mxu0 0
    %1856 = vmatmul.mubr.bf16.gmra.mrb[0].mxu0 %v1757
    %v1857 = vpop.f32.mrb[0].mxu0
    %v1858 = vadd.f32 %v1774, %v1857
    %v1859 = vpop.f32.mrb[0].mxu0
    %v1860 = vpop.f32.mrb[0].mxu0
    %v1861 = vpop.f32.mrb[0].mxu0
    %1862 = vdwg.mxu0
    %v1863 = vmax.f32 %v1858, 0.0
    %v1864 = vpack.c.bf16 %v1863, %v1863
    %v1865 = vld [vmem:[#allocation12] sm:$0xf]
    %v1866 = vld [vmem:[#allocation12 + $0x4] sm:$0xf]
    %v1867 = vld [vmem:[#allocation12 + $0x8] sm:$0xf]
    %v1868 = vld [vmem:[#allocation12 + $0xc] sm:$0xf]
    %v1869 = vld [vmem:[#allocation12 + $0x10] sm:$0xf]
    %v1870 = vld [vmem:[#allocation12 + $0x14] sm:$0xf]
    %v1871 = vld [vmem:[#allocation12 + $0x18] sm:$0xf]
    %v1872 = vld [vmem:[#allocation12 + $0x1c] sm:$0xf]
    %v1873 = vld [vmem:[#allocation12 + $0x20] sm:$0xf]
    %v1874 = vld [vmem:[#allocation12 + $0x24] sm:$0xf]
    %v1875 = vld [vmem:[#allocation12 + $0x28] sm:$0xf]
    %v1876 = vld [vmem:[#allocation12 + $0x2c] sm:$0xf]
    %v1877 = vld [vmem:[#allocation12 + $0x30] sm:$0xf]
    %v1878 = vld [vmem:[#allocation12 + $0x34] sm:$0xf]
    %v1879 = vld [vmem:[#allocation12 + $0x38] sm:$0xf]
    %v1880 = vld [vmem:[#allocation12 + $0x3c] sm:$0xf]
    %v1881 = vld [vmem:[%s9 + $0x3] ss:$0 sm:$0xff]
    %v1898 = vunpack.c.l.b16 %v1865
    %v1899 = vunpack.c.l.b16 %v1866
    %v1900 = vunpack.c.l.b16 %v1867
    %v1901 = vunpack.c.l.b16 %v1868
    %v1902 = vunpack.c.l.b16 %v1869
    %v1903 = vunpack.c.l.b16 %v1870
    %v1904 = vunpack.c.l.b16 %v1871
    %v1905 = vunpack.c.l.b16 %v1872
    %v1906 = vunpack.c.l.b16 %v1873
    %v1907 = vunpack.c.l.b16 %v1874
    %v1908 = vunpack.c.l.b16 %v1875
    %v1909 = vunpack.c.l.b16 %v1876
    %v1910 = vunpack.c.l.b16 %v1877
    %v1911 = vunpack.c.l.b16 %v1878
    %v1912 = vunpack.c.l.b16 %v1879
    %v1913 = vunpack.c.l.b16 %v1880
    %v1914 = vpack.c.b16 %v1899, %v1898
    %v1915 = vpack.c.b16 %v1901, %v1900
    %v1916 = vpack.c.b16 %v1903, %v1902
    %v1917 = vpack.c.b16 %v1905, %v1904
    %v1918 = vpack.c.b16 %v1907, %v1906
    %v1919 = vpack.c.b16 %v1909, %v1908
    %v1920 = vpack.c.b16 %v1911, %v1910
    %v1921 = vpack.c.b16 %v1913, %v1912
    %1930 = vmatprep.subr.bf16.mxu0 0
    %1931 = vmatpush1.bf16.msra.mxu0 %v1914
    %1932 = vmatprep.subr.bf16.mxu0 0
    %1933 = vmatpush1.bf16.msra.mxu0 %v1915
    %1934 = vmatprep.subr.bf16.mxu0 0
    %1935 = vmatpush1.bf16.msra.mxu0 %v1916
    %1936 = vmatprep.subr.bf16.mxu0 0
    %1937 = vmatpush1.bf16.msra.mxu0 %v1917
    %1938 = vmatprep.subr.bf16.mxu0 0
    %1939 = vmatpush1.bf16.msra.mxu0 %v1918
    %1940 = vmatprep.subr.bf16.mxu0 0
    %1941 = vmatpush1.bf16.msra.mxu0 %v1919
    %1942 = vmatprep.subr.bf16.mxu0 0
    %1943 = vmatpush1.bf16.msra.mxu0 %v1920
    %1944 = vmatprep.subr.bf16.mxu0 0
    %1945 = vmatpush1.bf16.msra.mxu0 %v1921
    %1946 = vmatprep.subr.bf16.mxu0 0
    %1947 = vmatpush1.bf16.msra.mxu0 0
    %1948 = vmatprep.subr.bf16.mxu0 0
    %1949 = vmatpush1.bf16.msra.mxu0 0
    %1950 = vmatprep.subr.bf16.mxu0 0
    %1951 = vmatpush1.bf16.msra.mxu0 0
    %1952 = vmatprep.subr.bf16.mxu0 0
    %1953 = vmatpush1.bf16.msra.mxu0 0
    %1954 = vmatprep.subr.bf16.mxu0 0
    %1955 = vmatpush1.bf16.msra.mxu0 0
    %1956 = vmatprep.subr.bf16.mxu0 0
    %1957 = vmatpush1.bf16.msra.mxu0 0
    %1958 = vmatprep.subr.bf16.mxu0 0
    %1959 = vmatpush1.bf16.msra.mxu0 0
    %1960 = vmatprep.subr.bf16.mxu0 0
    %1961 = vmatpush1.bf16.msra.mxu0 0
    %1962 = vmatprep.mubr.bf16.mxu0 0
    %1963 = vmatmul.mubr.bf16.gmra.mrb[0].mxu0 %v1864
    %v1964 = vpop.f32.mrb[0].mxu0
    %v1965 = vadd.f32 %v1881, %v1964
    %v1966 = vpop.f32.mrb[0].mxu0
    %v1967 = vpop.f32.mrb[0].mxu0
    %v1968 = vpop.f32.mrb[0].mxu0
    %1969 = vdwg.mxu0
    %v1970 = vmax.f32 %v1965, 0.0
    %v1971 = vpack.c.bf16 %v1970, %v1970
    %v1972 = vld [vmem:[#allocation13] sm:$0xf]
    %v1973 = vld [vmem:[#allocation13 + $0x4] sm:$0xf]
    %v1974 = vld [vmem:[#allocation13 + $0x8] sm:$0xf]
    %v1975 = vld [vmem:[#allocation13 + $0xc] sm:$0xf]
    %v1976 = vld [vmem:[#allocation13 + $0x10] sm:$0xf]
    %v1977 = vld [vmem:[#allocation13 + $0x14] sm:$0xf]
    %v1978 = vld [vmem:[#allocation13 + $0x18] sm:$0xf]
    %v1979 = vld [vmem:[#allocation13 + $0x1c] sm:$0xf]
    %v1980 = vld [vmem:[#allocation13 + $0x20] sm:$0xf]
    %v1981 = vld [vmem:[#allocation13 + $0x24] sm:$0xf]
    %v1982 = vld [vmem:[#allocation13 + $0x28] sm:$0xf]
    %v1983 = vld [vmem:[#allocation13 + $0x2c] sm:$0xf]
    %v1984 = vld [vmem:[#allocation13 + $0x30] sm:$0xf]
    %v1985 = vld [vmem:[#allocation13 + $0x34] sm:$0xf]
    %v1986 = vld [vmem:[#allocation13 + $0x38] sm:$0xf]
    %v1987 = vld [vmem:[#allocation13 + $0x3c] sm:$0xf]
    %v1988 = vld [vmem:[%s9 + $0x4] ss:$0 sm:$0xff]
    %v2005 = vunpack.c.l.b16 %v1972
    %v2006 = vunpack.c.l.b16 %v1973
    %v2007 = vunpack.c.l.b16 %v1974
    %v2008 = vunpack.c.l.b16 %v1975
    %v2009 = vunpack.c.l.b16 %v1976
    %v2010 = vunpack.c.l.b16 %v1977
    %v2011 = vunpack.c.l.b16 %v1978
    %v2012 = vunpack.c.l.b16 %v1979
    %v2013 = vunpack.c.l.b16 %v1980
    %v2014 = vunpack.c.l.b16 %v1981
    %v2015 = vunpack.c.l.b16 %v1982
    %v2016 = vunpack.c.l.b16 %v1983
    %v2017 = vunpack.c.l.b16 %v1984
    %v2018 = vunpack.c.l.b16 %v1985
    %v2019 = vunpack.c.l.b16 %v1986
    %v2020 = vunpack.c.l.b16 %v1987
    %v2021 = vpack.c.b16 %v2006, %v2005
    %v2022 = vpack.c.b16 %v2008, %v2007
    %v2023 = vpack.c.b16 %v2010, %v2009
    %v2024 = vpack.c.b16 %v2012, %v2011
    %v2025 = vpack.c.b16 %v2014, %v2013
    %v2026 = vpack.c.b16 %v2016, %v2015
    %v2027 = vpack.c.b16 %v2018, %v2017
    %v2028 = vpack.c.b16 %v2020, %v2019
    %2037 = vmatprep.subr.bf16.mxu0 0
    %2038 = vmatpush1.bf16.msra.mxu0 %v2021
    %2039 = vmatprep.subr.bf16.mxu0 0
    %2040 = vmatpush1.bf16.msra.mxu0 %v2022
    %2041 = vmatprep.subr.bf16.mxu0 0
    %2042 = vmatpush1.bf16.msra.mxu0 %v2023
    %2043 = vmatprep.subr.bf16.mxu0 0
    %2044 = vmatpush1.bf16.msra.mxu0 %v2024
    %2045 = vmatprep.subr.bf16.mxu0 0
    %2046 = vmatpush1.bf16.msra.mxu0 %v2025
    %2047 = vmatprep.subr.bf16.mxu0 0
    %2048 = vmatpush1.bf16.msra.mxu0 %v2026
    %2049 = vmatprep.subr.bf16.mxu0 0
    %2050 = vmatpush1.bf16.msra.mxu0 %v2027
    %2051 = vmatprep.subr.bf16.mxu0 0
    %2052 = vmatpush1.bf16.msra.mxu0 %v2028
    %2053 = vmatprep.subr.bf16.mxu0 0
    %2054 = vmatpush1.bf16.msra.mxu0 0
    %2055 = vmatprep.subr.bf16.mxu0 0
    %2056 = vmatpush1.bf16.msra.mxu0 0
    %2057 = vmatprep.subr.bf16.mxu0 0
    %2058 = vmatpush1.bf16.msra.mxu0 0
    %2059 = vmatprep.subr.bf16.mxu0 0
    %2060 = vmatpush1.bf16.msra.mxu0 0
    %2061 = vmatprep.subr.bf16.mxu0 0
    %2062 = vmatpush1.bf16.msra.mxu0 0
    %2063 = vmatprep.subr.bf16.mxu0 0
    %2064 = vmatpush1.bf16.msra.mxu0 0
    %2065 = vmatprep.subr.bf16.mxu0 0
    %2066 = vmatpush1.bf16.msra.mxu0 0
    %2067 = vmatprep.subr.bf16.mxu0 0
    %2068 = vmatpush1.bf16.msra.mxu0 0
    %2069 = vmatprep.mubr.bf16.mxu0 0
    %2070 = vmatmul.mubr.bf16.gmra.mrb[0].mxu0 %v1971
    %v2071 = vpop.f32.mrb[0].mxu0
    %v2072 = vadd.f32 %v1988, %v2071
    %v2073 = vpop.f32.mrb[0].mxu0
    %v2074 = vpop.f32.mrb[0].mxu0
    %v2075 = vpop.f32.mrb[0].mxu0
    %2076 = vdwg.mxu0
    %v2077 = vmax.f32 %v2072, 0.0
    %v2078 = vpack.c.bf16 %v2077, %v2077
    %v2079 = vld [vmem:[#allocation15] sm:$0xf]
    %v2080 = vld [vmem:[#allocation15 + $0x4] sm:$0xf]
    %v2081 = vld [vmem:[#allocation15 + $0x8] sm:$0xf]
    %v2082 = vld [vmem:[#allocation15 + $0xc] sm:$0xf]
    %v2083 = vld [vmem:[#allocation15 + $0x10] sm:$0xf]
    %v2084 = vld [vmem:[#allocation15 + $0x14] sm:$0xf]
    %v2085 = vld [vmem:[#allocation15 + $0x18] sm:$0xf]
    %v2086 = vld [vmem:[#allocation15 + $0x1c] sm:$0xf]
    %v2087 = vld [vmem:[#allocation15 + $0x20] sm:$0xf]
    %v2088 = vld [vmem:[#allocation15 + $0x24] sm:$0xf]
    %v2089 = vld [vmem:[#allocation15 + $0x28] sm:$0xf]
    %v2090 = vld [vmem:[#allocation15 + $0x2c] sm:$0xf]
    %v2091 = vld [vmem:[#allocation15 + $0x30] sm:$0xf]
    %v2092 = vld [vmem:[#allocation15 + $0x34] sm:$0xf]
    %v2093 = vld [vmem:[#allocation15 + $0x38] sm:$0xf]
    %v2094 = vld [vmem:[#allocation15 + $0x3c] sm:$0xf]
    %v2095 = vld [vmem:[%s9 + $0x5] ss:$0 sm:$0xff]
    %v2112 = vunpack.c.l.b16 %v2079
    %v2113 = vunpack.c.l.b16 %v2080
    %v2114 = vunpack.c.l.b16 %v2081
    %v2115 = vunpack.c.l.b16 %v2082
    %v2116 = vunpack.c.l.b16 %v2083
    %v2117 = vunpack.c.l.b16 %v2084
    %v2118 = vunpack.c.l.b16 %v2085
    %v2119 = vunpack.c.l.b16 %v2086
    %v2120 = vunpack.c.l.b16 %v2087
    %v2121 = vunpack.c.l.b16 %v2088
    %v2122 = vunpack.c.l.b16 %v2089
    %v2123 = vunpack.c.l.b16 %v2090
    %v2124 = vunpack.c.l.b16 %v2091
    %v2125 = vunpack.c.l.b16 %v2092
    %v2126 = vunpack.c.l.b16 %v2093
    %v2127 = vunpack.c.l.b16 %v2094
    %v2128 = vpack.c.b16 %v2113, %v2112
    %v2129 = vpack.c.b16 %v2115, %v2114
    %v2130 = vpack.c.b16 %v2117, %v2116
    %v2131 = vpack.c.b16 %v2119, %v2118
    %v2132 = vpack.c.b16 %v2121, %v2120
    %v2133 = vpack.c.b16 %v2123, %v2122
    %v2134 = vpack.c.b16 %v2125, %v2124
    %v2135 = vpack.c.b16 %v2127, %v2126
    %2144 = vmatprep.subr.bf16.mxu0 0
    %2145 = vmatpush1.bf16.msra.mxu0 %v2128
    %2146 = vmatprep.subr.bf16.mxu0 0
    %2147 = vmatpush1.bf16.msra.mxu0 %v2129
    %2148 = vmatprep.subr.bf16.mxu0 0
    %2149 = vmatpush1.bf16.msra.mxu0 %v2130
    %2150 = vmatprep.subr.bf16.mxu0 0
    %2151 = vmatpush1.bf16.msra.mxu0 %v2131
    %2152 = vmatprep.subr.bf16.mxu0 0
    %2153 = vmatpush1.bf16.msra.mxu0 %v2132
    %2154 = vmatprep.subr.bf16.mxu0 0
    %2155 = vmatpush1.bf16.msra.mxu0 %v2133
    %2156 = vmatprep.subr.bf16.mxu0 0
    %2157 = vmatpush1.bf16.msra.mxu0 %v2134
    %2158 = vmatprep.subr.bf16.mxu0 0
    %2159 = vmatpush1.bf16.msra.mxu0 %v2135
    %2160 = vmatprep.subr.bf16.mxu0 0
    %2161 = vmatpush1.bf16.msra.mxu0 0
    %2162 = vmatprep.subr.bf16.mxu0 0
    %2163 = vmatpush1.bf16.msra.mxu0 0
    %2164 = vmatprep.subr.bf16.mxu0 0
    %2165 = vmatpush1.bf16.msra.mxu0 0
    %2166 = vmatprep.subr.bf16.mxu0 0
    %2167 = vmatpush1.bf16.msra.mxu0 0
    %2168 = vmatprep.subr.bf16.mxu0 0
    %2169 = vmatpush1.bf16.msra.mxu0 0
    %2170 = vmatprep.subr.bf16.mxu0 0
    %2171 = vmatpush1.bf16.msra.mxu0 0
    %2172 = vmatprep.subr.bf16.mxu0 0
    %2173 = vmatpush1.bf16.msra.mxu0 0
    %2174 = vmatprep.subr.bf16.mxu0 0
    %2175 = vmatpush1.bf16.msra.mxu0 0
    %2176 = vmatprep.mubr.bf16.mxu0 0
    %2177 = vmatmul.mubr.bf16.gmra.mrb[0].mxu0 %v2078
    %v2178 = vpop.f32.mrb[0].mxu0
    %v2179 = vadd.f32 %v2095, %v2178
    %v2180 = vpop.f32.mrb[0].mxu0
    %v2181 = vpop.f32.mrb[0].mxu0
    %v2182 = vpop.f32.mrb[0].mxu0
    %2183 = vdwg.mxu0
    %vm2184 = vcmask 15360
    %2185 = vst.msk [vmem:[%s10] sm:$0xff] %vm2184, %v2179
    // Predicated region
    $region78: #{tpu_custom_call.1} parent=1 // pred_check
      _
    $region79: #{tpu_custom_call.1} parent=1 // pred_check_branch
      %2187 = sbr.rel (0) target = $region81
    $region80: #{tpu_custom_call.1} parent=1 // pred_region
      _
    $region81: #{tpu_custom_call.1} parent=1 // pred_fallthru
      _
    // Predicated region
    $region82: #{tpu_custom_call.1} parent=1 // pred_check
      _
    $region83: #{tpu_custom_call.1} parent=1 // pred_check_branch
      %2189 = sbr.rel (0) target = $region85
    $region84: #{tpu_custom_call.1} parent=1 // pred_region
      _
    $region85: #{tpu_custom_call.1} parent=1 // pred_fallthru
      _
    %2190 = vsyncpa [#allocation3], 1
    %2191 = vsyncpa [#allocation5], 1
    %2192 = vsyncpa [#allocation8], 1
    %2193 = vsyncpa [#allocation11], 1
    %2194 = vsyncpa [#allocation14], 1

</llo_original>
